<compile_context>
chip_gen: v7x
topology: tpu7x:2x2x1
jax: 0.10.0
libtpu: 0.0.40
codegen_flags: <defaults>
</compile_context>

<pallas_src>
import jax
import jax.numpy as jnp
from jax.experimental import pallas as pl
from jax.experimental.pallas import tpu as pltpu

LN_EPS = 1e-5


def _gelu_exact(x):
    # torch.nn.GELU() default == exact erf formulation
    return 0.5 * x * (1.0 + jax.lax.erf(x / jnp.sqrt(2.0).astype(x.dtype)))


def mixer_kernel(x_ref, mavg_ref,
                 g1_ref, be1_ref,          # ln1 gamma/beta, lane-tiled: (1, L)
                 tw1_ref, tb1_ref,         # token fc1: (Tm, T) bf16, (Tm, 1) f32
                 tw2_ref, tb2_ref,         # token fc2: (T, Tm) bf16, (T, 1) f32
                 g2_ref, be2_ref,          # ln2 gamma/beta, lane-tiled: (1, L)
                 cw1_ref, cb1_ref,         # chan fc1 block-diag: (L, bb*Cm) bf16, (1, bb*Cm)
                 cw2_ref, cb2_ref,         # chan fc2 block-diag: (bb*Cm, L) bf16, (1, L)
                 out_ref):
    x = x_ref[0].astype(jnp.float32)                       # (T, L), L = bb*C
    mavg = mavg_ref[...]                                   # (L, L) block-diag 1/C

    def group_layernorm(v, gamma, beta):
        # per-C-lane-group mean/var via averaging-matrix matmuls (MXU, lane-dense)
        mu = jnp.dot(v, mavg, preferred_element_type=jnp.float32)
        d = v - mu
        var = jnp.dot(d * d, mavg, preferred_element_type=jnp.float32)
        return d * jax.lax.rsqrt(var + LN_EPS) * gamma + beta

    # --- token mixing branch -------------------------------------------------
    y = group_layernorm(x, g1_ref[...], be1_ref[...])      # (T, L) f32
    # token_mixer on permuted y == W2 @ gelu(W1 @ y + b1) + b2 (per packed batch)
    h = jnp.dot(tw1_ref[...], y.astype(jnp.bfloat16),
                preferred_element_type=jnp.float32) + tb1_ref[...]      # (Tm, L)
    h = _gelu_exact(h)
    ymix = jnp.dot(tw2_ref[...], h.astype(jnp.bfloat16),
                   preferred_element_type=jnp.float32) + tb2_ref[...]   # (T, L)
    x = x + ymix                                           # residual

    # --- channel mixing branch ------------------------------------------------
    y2 = group_layernorm(x, g2_ref[...], be2_ref[...])     # (T, L)
    h2 = jnp.dot(y2.astype(jnp.bfloat16), cw1_ref[...],
                 preferred_element_type=jnp.float32) + cb1_ref[...]     # (T, bb*Cm)
    h2 = _gelu_exact(h2)
    cmix = jnp.dot(h2.astype(jnp.bfloat16), cw2_ref[...],
                   preferred_element_type=jnp.float32) + cb2_ref[...]   # (T, L)

    out_ref[0] = (x + cmix).astype(out_ref.dtype)


def _block_diag(w, n):
    """(a, b) -> (n*a, n*b) block-diagonal matrix with `w` repeated on the diagonal."""
    a, b = w.shape
    eye = jnp.eye(n, dtype=w.dtype)
    return (eye[:, None, :, None] * w[None, :, None, :]).reshape(n * a, n * b)


def _pick_block_batch(B, C):
    """Largest divisor of B whose packed lane width bb*C does not exceed 128."""
    target = max(1, 128 // C)
    bb = 1
    for cand in range(1, B + 1):
        if B % cand == 0 and cand <= target:
            bb = cand
    return bb


def mixer_unit_forward(x, params, block_batch=None):
    B, T, C = x.shape
    Tm = params["token_w1"].shape[0]
    Cm = params["chan_w1_t"].shape[1]

    bb = block_batch if block_batch is not None else _pick_block_batch(B, C)
    assert B % bb == 0, "batch must be divisible by the batch block"
    G = B // bb
    L = bb * C
    Hm = bb * Cm

    # Pack bb batches along the lane axis: (B, T, C) -> (G, T, bb*C).
    xp = x.reshape(G, bb, T, C).transpose(0, 2, 1, 3).reshape(G, T, L)

    # Host-side parameter prep (tiny; pure layout plumbing).
    mavg = _block_diag(jnp.full((C, C), 1.0 / C, jnp.float32), bb)     # (L, L)
    g1 = jnp.tile(params["ln1_g"], (1, bb))
    b1 = jnp.tile(params["ln1_b"], (1, bb))
    g2 = jnp.tile(params["ln2_g"], (1, bb))
    b2 = jnp.tile(params["ln2_b"], (1, bb))
    tw1 = params["token_w1"].astype(jnp.bfloat16)                      # (Tm, T)
    tw2 = params["token_w2"].astype(jnp.bfloat16)                      # (T, Tm)
    tb1 = params["token_b1"]                                           # (Tm, 1)
    tb2 = params["token_b2"]                                           # (T, 1)
    cw1 = _block_diag(params["chan_w1_t"], bb).astype(jnp.bfloat16)    # (L, Hm)
    cw2 = _block_diag(params["chan_w2_t"], bb).astype(jnp.bfloat16)    # (Hm, L)
    cb1 = jnp.tile(params["chan_b1"], (1, bb))                         # (1, Hm)
    cb2 = jnp.tile(params["chan_b2"], (1, bb))                         # (1, L)

    def full(shape):
        return pl.BlockSpec(shape, lambda g: (0,) * len(shape))

    in_specs = [
        pl.BlockSpec((1, T, L), lambda g: (g, 0, 0)),   # packed activations
        full((L, L)),                                   # LN averaging matrix
        full((1, L)), full((1, L)),                     # ln1 gamma, beta
        full((Tm, T)), full((Tm, 1)),                   # token fc1 W, b
        full((T, Tm)), full((T, 1)),                    # token fc2 W, b
        full((1, L)), full((1, L)),                     # ln2 gamma, beta
        full((L, Hm)), full((1, Hm)),                   # channel fc1 (block-diag), b
        full((Hm, L)), full((1, L)),                    # channel fc2 (block-diag), b
    ]

    out_p = pl.pallas_call(
        mixer_kernel,
        out_shape=jax.ShapeDtypeStruct((G, T, L), x.dtype),
        grid_spec=pltpu.PrefetchScalarGridSpec(
            num_scalar_prefetch=0,
            grid=(G,),
            in_specs=in_specs,
            out_specs=pl.BlockSpec((1, T, L), lambda g: (g, 0, 0)),
        ),
        compiler_params=pltpu.CompilerParams(
            dimension_semantics=("parallel",)),
    )(xp, mavg, g1, b1, tw1, tb1, tw2, tb2, g2, b2, cw1, cb1, cw2, cb2)

    # Unpack back to (B, T, C).
    return out_p.reshape(G, T, bb, C).transpose(0, 2, 1, 3).reshape(B, T, C)


def init_params(key, nb_tokens, nb_channels, token_mlp_dim, channel_mlp_dim):
    ks = jax.random.split(key, 8)
    scale = 0.02
    return {
        # LayerNorm params (torch default init is ones / zeros)
        "ln1_g": jnp.ones((1, nb_channels), jnp.float32),
        "ln1_b": jnp.zeros((1, nb_channels), jnp.float32),
        "ln2_g": jnp.ones((1, nb_channels), jnp.float32),
        "ln2_b": jnp.zeros((1, nb_channels), jnp.float32),
        # token mixer (Linear(nb_tokens -> token_mlp_dim), Linear(token_mlp_dim -> nb_tokens))
        "token_w1": scale * jax.random.normal(ks[0], (token_mlp_dim, nb_tokens), jnp.float32),
        "token_b1": scale * jax.random.normal(ks[1], (token_mlp_dim, 1), jnp.float32),
        "token_w2": scale * jax.random.normal(ks[2], (nb_tokens, token_mlp_dim), jnp.float32),
        "token_b2": scale * jax.random.normal(ks[3], (nb_tokens, 1), jnp.float32),
        # channel mixer, weights stored pre-transposed for y @ W^T
        "chan_w1_t": scale * jax.random.normal(ks[4], (nb_channels, channel_mlp_dim), jnp.float32),
        "chan_b1": scale * jax.random.normal(ks[5], (1, channel_mlp_dim), jnp.float32),
        "chan_w2_t": scale * jax.random.normal(ks[6], (channel_mlp_dim, nb_channels), jnp.float32),
        "chan_b2": scale * jax.random.normal(ks[7], (1, nb_channels), jnp.float32),
    }


def mixer_unit_reference(x, p):
    """Pure-JAX f32 reference mirroring the PyTorch forward exactly."""
    def ln(v, g, b):
        mu = jnp.mean(v, axis=-1, keepdims=True)
        var = jnp.mean((v - mu) ** 2, axis=-1, keepdims=True)
        return (v - mu) / jnp.sqrt(var + LN_EPS) * g[0] + b[0]

    y = ln(x, p["ln1_g"], p["ln1_b"])
    y = jnp.transpose(y, (0, 2, 1))                               # (B, C, T)
    y = _gelu_exact(y @ p["token_w1"].T + p["token_b1"][:, 0])
    y = y @ p["token_w2"].T + p["token_b2"][:, 0]
    y = jnp.transpose(y, (0, 2, 1))                               # (B, T, C)
    x = x + y
    y = ln(x, p["ln2_g"], p["ln2_b"])
    y = _gelu_exact(y @ p["chan_w1_t"] + p["chan_b1"][0])
    y = y @ p["chan_w2_t"] + p["chan_b2"][0]
    return x + y


if __name__ == "__main__":
    # small but lane-dense: 4 batches x 32 channels pack into 128 lanes,
    # and B=8 gives a 2-step grid (both v7x TensorCores get work).
    B, T, C = 8, 16, 32               # batch, nb_tokens, nb_channels
    token_mlp_dim, channel_mlp_dim = 64, 64

    key = jax.random.PRNGKey(0)
    kx, kp = jax.random.split(key)
    x = jax.random.normal(kx, (B, T, C), jnp.float32)
    params = init_params(kp, T, C, token_mlp_dim, channel_mlp_dim)

    out = mixer_unit_forward(x, params)
    out = jax.block_until_ready(out)

    ref = mixer_unit_reference(x, params)
    assert out.shape == (B, T, C)
    err = float(jnp.max(jnp.abs(out - ref)))
    # kernel runs its GEMMs in bf16 (f32 accumulation) -> loosened tolerance
    # vs. the pure-f32 reference.
    assert err < 1e-2, err

    print("KERNEL_OK")
</pallas_src>

<mosaic_0001>
module attributes {stable_mosaic.version = 11 : i64} {
  func.func @mixer_kernel(%arg0: i32, %arg1: memref<1x16x128xf32, #tpu.memory_space<vmem>>, %arg2: memref<128x128xf32, #tpu.memory_space<vmem>>, %arg3: memref<1x128xf32, #tpu.memory_space<vmem>>, %arg4: memref<1x128xf32, #tpu.memory_space<vmem>>, %arg5: memref<64x16xbf16, #tpu.memory_space<vmem>>, %arg6: memref<64x1xf32, #tpu.memory_space<vmem>>, %arg7: memref<16x64xbf16, #tpu.memory_space<vmem>>, %arg8: memref<16x1xf32, #tpu.memory_space<vmem>>, %arg9: memref<1x128xf32, #tpu.memory_space<vmem>>, %arg10: memref<1x128xf32, #tpu.memory_space<vmem>>, %arg11: memref<128x256xbf16, #tpu.memory_space<vmem>>, %arg12: memref<1x256xf32, #tpu.memory_space<vmem>>, %arg13: memref<256x128xbf16, #tpu.memory_space<vmem>>, %arg14: memref<1x128xf32, #tpu.memory_space<vmem>>, %arg15: memref<1x16x128xf32, #tpu.memory_space<vmem>>) attributes {dimension_semantics = [#tpu.dimension_semantics<parallel>], iteration_bounds = array<i64: 2>, scalar_prefetch = 0 : i64, scratch_operands = 0 : i64, tpu.core_type = #tpu.core_type<tc>, window_params = [{transform_indices = @transform_0, window_bounds = array<i64: 1, 16, 128>}, {pipeline_mode = #tpu.pipeline_mode<synchronous>, transform_indices = @transform_1, window_bounds = array<i64: 128, 128>}, {pipeline_mode = #tpu.pipeline_mode<synchronous>, transform_indices = @transform_2, window_bounds = array<i64: 1, 128>}, {pipeline_mode = #tpu.pipeline_mode<synchronous>, transform_indices = @transform_3, window_bounds = array<i64: 1, 128>}, {pipeline_mode = #tpu.pipeline_mode<synchronous>, transform_indices = @transform_4, window_bounds = array<i64: 64, 16>}, {pipeline_mode = #tpu.pipeline_mode<synchronous>, transform_indices = @transform_5, window_bounds = array<i64: 64, 1>}, {pipeline_mode = #tpu.pipeline_mode<synchronous>, transform_indices = @transform_6, window_bounds = array<i64: 16, 64>}, {pipeline_mode = #tpu.pipeline_mode<synchronous>, transform_indices = @transform_7, window_bounds = array<i64: 16, 1>}, {pipeline_mode = #tpu.pipeline_mode<synchronous>, transform_indices = @transform_8, window_bounds = array<i64: 1, 128>}, {pipeline_mode = #tpu.pipeline_mode<synchronous>, transform_indices = @transform_9, window_bounds = array<i64: 1, 128>}, {pipeline_mode = #tpu.pipeline_mode<synchronous>, transform_indices = @transform_10, window_bounds = array<i64: 128, 256>}, {pipeline_mode = #tpu.pipeline_mode<synchronous>, transform_indices = @transform_11, window_bounds = array<i64: 1, 256>}, {pipeline_mode = #tpu.pipeline_mode<synchronous>, transform_indices = @transform_12, window_bounds = array<i64: 256, 128>}, {pipeline_mode = #tpu.pipeline_mode<synchronous>, transform_indices = @transform_13, window_bounds = array<i64: 1, 128>}, {transform_indices = @transform_14, window_bounds = array<i64: 1, 16, 128>}]} {
    %c0 = arith.constant 0 : index
    %c0_0 = arith.constant 0 : index
    %c0_1 = arith.constant 0 : index
    %0 = vector.load %arg1[%c0, %c0_0, %c0_1] : memref<1x16x128xf32, #tpu.memory_space<vmem>>, vector<1x16x128xf32>
    %1 = vector.shape_cast %0 : vector<1x16x128xf32> to vector<16x128xf32>
    %c0_2 = arith.constant 0 : index
    %c0_3 = arith.constant 0 : index
    %2 = vector.load %arg2[%c0_2, %c0_3] : memref<128x128xf32, #tpu.memory_space<vmem>>, vector<128x128xf32>
    %c0_4 = arith.constant 0 : index
    %c0_5 = arith.constant 0 : index
    %3 = vector.load %arg3[%c0_4, %c0_5] : memref<1x128xf32, #tpu.memory_space<vmem>>, vector<1x128xf32>
    %c0_6 = arith.constant 0 : index
    %c0_7 = arith.constant 0 : index
    %4 = vector.load %arg4[%c0_6, %c0_7] : memref<1x128xf32, #tpu.memory_space<vmem>>, vector<1x128xf32>
    %cst = arith.constant dense<0.000000e+00> : vector<16x128xf32>
    %5 = tpu.matmul %1, %2, %cst {dimension_numbers = #tpu.dot_dimension_numbers<[1], [0], [0], [1], [0, 0, 1, 1], [], []>} : vector<16x128xf32>, vector<128x128xf32>, vector<16x128xf32> -> vector<16x128xf32>
    %6 = arith.subf %1, %5 : vector<16x128xf32>
    %7 = arith.mulf %6, %6 : vector<16x128xf32>
    %cst_8 = arith.constant dense<0.000000e+00> : vector<16x128xf32>
    %8 = tpu.matmul %7, %2, %cst_8 {dimension_numbers = #tpu.dot_dimension_numbers<[1], [0], [0], [1], [0, 0, 1, 1], [], []>} : vector<16x128xf32>, vector<128x128xf32>, vector<16x128xf32> -> vector<16x128xf32>
    %cst_9 = arith.constant 9.99999974E-6 : f32
    %9 = vector.broadcast %cst_9 : f32 to vector<16x128xf32>
    %10 = arith.addf %8, %9 : vector<16x128xf32>
    %11 = math.rsqrt %10 : vector<16x128xf32>
    %12 = arith.mulf %6, %11 : vector<16x128xf32>
    %13 = vector.broadcast %3 : vector<1x128xf32> to vector<16x128xf32>
    %14 = arith.mulf %12, %13 : vector<16x128xf32>
    %15 = vector.broadcast %4 : vector<1x128xf32> to vector<16x128xf32>
    %16 = arith.addf %14, %15 : vector<16x128xf32>
    %c0_10 = arith.constant 0 : index
    %c0_11 = arith.constant 0 : index
    %17 = vector.load %arg5[%c0_10, %c0_11] : memref<64x16xbf16, #tpu.memory_space<vmem>>, vector<64x16xbf16>
    %18 = arith.truncf %16 : vector<16x128xf32> to vector<16x128xbf16>
    %cst_12 = arith.constant dense<0.000000e+00> : vector<64x128xf32>
    %19 = tpu.matmul %17, %18, %cst_12 {dimension_numbers = #tpu.dot_dimension_numbers<[1], [0], [0], [1], [0, 0, 1, 1], [], []>} : vector<64x16xbf16>, vector<16x128xbf16>, vector<64x128xf32> -> vector<64x128xf32>
    %c0_13 = arith.constant 0 : index
    %c0_14 = arith.constant 0 : index
    %20 = vector.load %arg6[%c0_13, %c0_14] : memref<64x1xf32, #tpu.memory_space<vmem>>, vector<64x1xf32>
    %21 = vector.broadcast %20 : vector<64x1xf32> to vector<64x128xf32>
    %22 = arith.addf %19, %21 : vector<64x128xf32>
    %cst_15 = arith.constant 5.000000e-01 : f32
    %23 = vector.broadcast %cst_15 : f32 to vector<64x128xf32>
    %24 = arith.mulf %23, %22 : vector<64x128xf32>
    %cst_16 = arith.constant 2.000000e+00 : f32
    %25 = math.sqrt %cst_16 : f32
    %26 = vector.broadcast %25 : f32 to vector<64x128xf32>
    %27 = arith.divf %22, %26 : vector<64x128xf32>
    %28 = math.erf %27 : vector<64x128xf32>
    %cst_17 = arith.constant 1.000000e+00 : f32
    %29 = vector.broadcast %cst_17 : f32 to vector<64x128xf32>
    %30 = arith.addf %29, %28 : vector<64x128xf32>
    %31 = arith.mulf %24, %30 : vector<64x128xf32>
    %c0_18 = arith.constant 0 : index
    %c0_19 = arith.constant 0 : index
    %32 = vector.load %arg7[%c0_18, %c0_19] : memref<16x64xbf16, #tpu.memory_space<vmem>>, vector<16x64xbf16>
    %33 = arith.truncf %31 : vector<64x128xf32> to vector<64x128xbf16>
    %cst_20 = arith.constant dense<0.000000e+00> : vector<16x128xf32>
    %34 = tpu.matmul %32, %33, %cst_20 {dimension_numbers = #tpu.dot_dimension_numbers<[1], [0], [0], [1], [0, 0, 1, 1], [], []>} : vector<16x64xbf16>, vector<64x128xbf16>, vector<16x128xf32> -> vector<16x128xf32>
    %c0_21 = arith.constant 0 : index
    %c0_22 = arith.constant 0 : index
    %35 = vector.load %arg8[%c0_21, %c0_22] : memref<16x1xf32, #tpu.memory_space<vmem>>, vector<16x1xf32>
    %36 = vector.broadcast %35 : vector<16x1xf32> to vector<16x128xf32>
    %37 = arith.addf %34, %36 : vector<16x128xf32>
    %38 = arith.addf %1, %37 : vector<16x128xf32>
    %c0_23 = arith.constant 0 : index
    %c0_24 = arith.constant 0 : index
    %39 = vector.load %arg9[%c0_23, %c0_24] : memref<1x128xf32, #tpu.memory_space<vmem>>, vector<1x128xf32>
    %c0_25 = arith.constant 0 : index
    %c0_26 = arith.constant 0 : index
    %40 = vector.load %arg10[%c0_25, %c0_26] : memref<1x128xf32, #tpu.memory_space<vmem>>, vector<1x128xf32>
    %cst_27 = arith.constant dense<0.000000e+00> : vector<16x128xf32>
    %41 = tpu.matmul %38, %2, %cst_27 {dimension_numbers = #tpu.dot_dimension_numbers<[1], [0], [0], [1], [0, 0, 1, 1], [], []>} : vector<16x128xf32>, vector<128x128xf32>, vector<16x128xf32> -> vector<16x128xf32>
    %42 = arith.subf %38, %41 : vector<16x128xf32>
    %43 = arith.mulf %42, %42 : vector<16x128xf32>
    %cst_28 = arith.constant dense<0.000000e+00> : vector<16x128xf32>
    %44 = tpu.matmul %43, %2, %cst_28 {dimension_numbers = #tpu.dot_dimension_numbers<[1], [0], [0], [1], [0, 0, 1, 1], [], []>} : vector<16x128xf32>, vector<128x128xf32>, vector<16x128xf32> -> vector<16x128xf32>
    %cst_29 = arith.constant 9.99999974E-6 : f32
    %45 = vector.broadcast %cst_29 : f32 to vector<16x128xf32>
    %46 = arith.addf %44, %45 : vector<16x128xf32>
    %47 = math.rsqrt %46 : vector<16x128xf32>
    %48 = arith.mulf %42, %47 : vector<16x128xf32>
    %49 = vector.broadcast %39 : vector<1x128xf32> to vector<16x128xf32>
    %50 = arith.mulf %48, %49 : vector<16x128xf32>
    %51 = vector.broadcast %40 : vector<1x128xf32> to vector<16x128xf32>
    %52 = arith.addf %50, %51 : vector<16x128xf32>
    %53 = arith.truncf %52 : vector<16x128xf32> to vector<16x128xbf16>
    %c0_30 = arith.constant 0 : index
    %c0_31 = arith.constant 0 : index
    %54 = vector.load %arg11[%c0_30, %c0_31] : memref<128x256xbf16, #tpu.memory_space<vmem>>, vector<128x256xbf16>
    %cst_32 = arith.constant dense<0.000000e+00> : vector<16x256xf32>
    %55 = tpu.matmul %53, %54, %cst_32 {dimension_numbers = #tpu.dot_dimension_numbers<[1], [0], [0], [1], [0, 0, 1, 1], [], []>} : vector<16x128xbf16>, vector<128x256xbf16>, vector<16x256xf32> -> vector<16x256xf32>
    %c0_33 = arith.constant 0 : index
    %c0_34 = arith.constant 0 : index
    %56 = vector.load %arg12[%c0_33, %c0_34] : memref<1x256xf32, #tpu.memory_space<vmem>>, vector<1x256xf32>
    %57 = vector.broadcast %56 : vector<1x256xf32> to vector<16x256xf32>
    %58 = arith.addf %55, %57 : vector<16x256xf32>
    %cst_35 = arith.constant 5.000000e-01 : f32
    %59 = vector.broadcast %cst_35 : f32 to vector<16x256xf32>
    %60 = arith.mulf %59, %58 : vector<16x256xf32>
    %cst_36 = arith.constant 2.000000e+00 : f32
    %61 = math.sqrt %cst_36 : f32
    %62 = vector.broadcast %61 : f32 to vector<16x256xf32>
    %63 = arith.divf %58, %62 : vector<16x256xf32>
    %64 = math.erf %63 : vector<16x256xf32>
    %cst_37 = arith.constant 1.000000e+00 : f32
    %65 = vector.broadcast %cst_37 : f32 to vector<16x256xf32>
    %66 = arith.addf %65, %64 : vector<16x256xf32>
    %67 = arith.mulf %60, %66 : vector<16x256xf32>
    %68 = arith.truncf %67 : vector<16x256xf32> to vector<16x256xbf16>
    %c0_38 = arith.constant 0 : index
    %c0_39 = arith.constant 0 : index
    %69 = vector.load %arg13[%c0_38, %c0_39] : memref<256x128xbf16, #tpu.memory_space<vmem>>, vector<256x128xbf16>
    %cst_40 = arith.constant dense<0.000000e+00> : vector<16x128xf32>
    %70 = tpu.matmul %68, %69, %cst_40 {dimension_numbers = #tpu.dot_dimension_numbers<[1], [0], [0], [1], [0, 0, 1, 1], [], []>} : vector<16x256xbf16>, vector<256x128xbf16>, vector<16x128xf32> -> vector<16x128xf32>
    %c0_41 = arith.constant 0 : index
    %c0_42 = arith.constant 0 : index
    %71 = vector.load %arg14[%c0_41, %c0_42] : memref<1x128xf32, #tpu.memory_space<vmem>>, vector<1x128xf32>
    %72 = vector.broadcast %71 : vector<1x128xf32> to vector<16x128xf32>
    %73 = arith.addf %70, %72 : vector<16x128xf32>
    %74 = arith.addf %38, %73 : vector<16x128xf32>
    %c0_43 = arith.constant 0 : index
    %c0_44 = arith.constant 0 : index
    %c0_45 = arith.constant 0 : index
    %75 = vector.load %arg15[%c0_43, %c0_44, %c0_45] : memref<1x16x128xf32, #tpu.memory_space<vmem>>, vector<1x16x128xf32>
    %76 = vector.shape_cast %75 : vector<1x16x128xf32> to vector<16x128xf32>
    %77 = vector.shape_cast %74 : vector<16x128xf32> to vector<1x16x128xf32>
    tpu.vector_store %arg15[%c0_43, %c0_44, %c0_45], %77 {strides = array<i32>} : memref<1x16x128xf32, #tpu.memory_space<vmem>>, vector<1x16x128xf32>,
    return
  }
  func.func @transform_0(%arg0: i32) -> (i32, i32, i32) {
    %c0_i32 = arith.constant 0 : i32
    %c0_i32_0 = arith.constant 0 : i32
    %c0_i32_1 = arith.constant 0 : i32
    return %arg0, %c0_i32, %c0_i32_0 : i32, i32, i32
  }
  func.func @transform_1(%arg0: i32) -> (i32, i32) {
    %c0_i32 = arith.constant 0 : i32
    %c0_i32_0 = arith.constant 0 : i32
    %c0_i32_1 = arith.constant 0 : i32
    return %c0_i32, %c0_i32_0 : i32, i32
  }
  func.func @transform_2(%arg0: i32) -> (i32, i32) {
    %c0_i32 = arith.constant 0 : i32
    %c0_i32_0 = arith.constant 0 : i32
    %c0_i32_1 = arith.constant 0 : i32
    return %c0_i32, %c0_i32_0 : i32, i32
  }
  func.func @transform_3(%arg0: i32) -> (i32, i32) {
    %c0_i32 = arith.constant 0 : i32
    %c0_i32_0 = arith.constant 0 : i32
    %c0_i32_1 = arith.constant 0 : i32
    return %c0_i32, %c0_i32_0 : i32, i32
  }
  func.func @transform_4(%arg0: i32) -> (i32, i32) {
    %c0_i32 = arith.constant 0 : i32
    %c0_i32_0 = arith.constant 0 : i32
    %c0_i32_1 = arith.constant 0 : i32
    return %c0_i32, %c0_i32_0 : i32, i32
  }
  func.func @transform_5(%arg0: i32) -> (i32, i32) {
    %c0_i32 = arith.constant 0 : i32
    %c0_i32_0 = arith.constant 0 : i32
    %c0_i32_1 = arith.constant 0 : i32
    return %c0_i32, %c0_i32_0 : i32, i32
  }
  func.func @transform_6(%arg0: i32) -> (i32, i32) {
    %c0_i32 = arith.constant 0 : i32
    %c0_i32_0 = arith.constant 0 : i32
    %c0_i32_1 = arith.constant 0 : i32
    return %c0_i32, %c0_i32_0 : i32, i32
  }
  func.func @transform_7(%arg0: i32) -> (i32, i32) {
    %c0_i32 = arith.constant 0 : i32
    %c0_i32_0 = arith.constant 0 : i32
    %c0_i32_1 = arith.constant 0 : i32
    return %c0_i32, %c0_i32_0 : i32, i32
  }
  func.func @transform_8(%arg0: i32) -> (i32, i32) {
    %c0_i32 = arith.constant 0 : i32
    %c0_i32_0 = arith.constant 0 : i32
    %c0_i32_1 = arith.constant 0 : i32
    return %c0_i32, %c0_i32_0 : i32, i32
  }
  func.func @transform_9(%arg0: i32) -> (i32, i32) {
    %c0_i32 = arith.constant 0 : i32
    %c0_i32_0 = arith.constant 0 : i32
    %c0_i32_1 = arith.constant 0 : i32
    return %c0_i32, %c0_i32_0 : i32, i32
  }
  func.func @transform_10(%arg0: i32) -> (i32, i32) {
    %c0_i32 = arith.constant 0 : i32
    %c0_i32_0 = arith.constant 0 : i32
    %c0_i32_1 = arith.constant 0 : i32
    return %c0_i32, %c0_i32_0 : i32, i32
  }
  func.func @transform_11(%arg0: i32) -> (i32, i32) {
    %c0_i32 = arith.constant 0 : i32
    %c0_i32_0 = arith.constant 0 : i32
    %c0_i32_1 = arith.constant 0 : i32
    return %c0_i32, %c0_i32_0 : i32, i32
  }
  func.func @transform_12(%arg0: i32) -> (i32, i32) {
    %c0_i32 = arith.constant 0 : i32
    %c0_i32_0 = arith.constant 0 : i32
    %c0_i32_1 = arith.constant 0 : i32
    return %c0_i32, %c0_i32_0 : i32, i32
  }
  func.func @transform_13(%arg0: i32) -> (i32, i32) {
    %c0_i32 = arith.constant 0 : i32
    %c0_i32_0 = arith.constant 0 : i32
    %c0_i32_1 = arith.constant 0 : i32
    return %c0_i32, %c0_i32_0 : i32, i32
  }
  func.func @transform_14(%arg0: i32) -> (i32, i32, i32) {
    %c0_i32 = arith.constant 0 : i32
    %c0_i32_0 = arith.constant 0 : i32
    %c0_i32_1 = arith.constant 0 : i32
    return %arg0, %c0_i32, %c0_i32_0 : i32, i32, i32
  }
}

</mosaic_0001>

<llo_original>
// kernel: tpu_custom_call.1
$region0: #{tpu_custom_call.1}
  #allocation0 [shape = 'u32[]', space=smem, size = 0x4, offset = 0x4, fixed_abs, tag = 'smem constant byte address 0x4 - core index']
  #allocation1 [shape = 'u32[144,128]{1,0:T(1,128)}', space=vmem, size = 0x12000, scoped, tag = 'internal scratch']
  %s0 = inlined_call_operand.hbm [shape: f32[2,16,128], index: 0, kind: input, shape index: {}]
  %s1 = inlined_call_operand.hbm [shape: f32[128,128], index: 1, kind: input, shape index: {}]
  %s2 = inlined_call_operand.vmem [shape: f32[1,128], index: 2, kind: input, shape index: {}]
  %s3 = inlined_call_operand.vmem [shape: f32[1,128], index: 3, kind: input, shape index: {}]
  %s4 = inlined_call_operand.vmem [shape: bf16[64,16], index: 4, kind: input, shape index: {}]
  %s5 = inlined_call_operand.vmem [shape: f32[64,1], index: 5, kind: input, shape index: {}]
  %s6 = inlined_call_operand.vmem [shape: bf16[16,64], index: 6, kind: input, shape index: {}]
  %s7 = inlined_call_operand.vmem [shape: f32[16,1], index: 7, kind: input, shape index: {}]
  %s8 = inlined_call_operand.vmem [shape: f32[1,128], index: 8, kind: input, shape index: {}]
  %s9 = inlined_call_operand.vmem [shape: f32[1,128], index: 9, kind: input, shape index: {}]
  %s10 = inlined_call_operand.vmem [shape: bf16[128,256], index: 10, kind: input, shape index: {}]
  %s11 = inlined_call_operand.vmem [shape: f32[1,256], index: 11, kind: input, shape index: {}]
  %s12 = inlined_call_operand.hbm [shape: bf16[256,128], index: 12, kind: input, shape index: {}]
  %s13 = inlined_call_operand.vmem [shape: f32[1,128], index: 13, kind: input, shape index: {}]
  %s14 = inlined_call_operand.hbm [shape: f32[2,16,128], index: 14, kind: output, shape index: {}]
  %s15 = sld [smem:[#allocation0]]
  $region101: #{tpu_custom_call.1} parent=0
    _
  %s17 = ssub.s32 1, %s15
  %s18 = scalar_select 0, %s17, %s15
  $region1: #{tpu_custom_call.1} parent=0
    #allocation2 [shape = 'u8[16384]{0}', space=vmem, size = 0x4000, scoped, tag = 'input window, operand 0']
    #allocation3 [shape = 's32[2]{0}', space=sflag, size = 0x8, scoped, tag = 'scoped memory for tpu_custom_call.1']
    #allocation4 [shape = 's32[2]{0}', space=sflag, size = 0x8, scoped, tag = 'scoped memory for tpu_custom_call.1']
    #allocation5 [shape = 'u8[65536]{0}', space=vmem, size = 0x10000, scoped, tag = 'input window, operand 1, single buffered']
    #allocation6 [shape = 's32[1]{0}', space=sflag, size = 0x4, scoped, tag = 'scoped memory for tpu_custom_call.1']
    #allocation7 [shape = 'u8[65536]{0}', space=vmem, size = 0x10000, scoped, tag = 'input window, operand 12, single buffered']
    #allocation8 [shape = 'u8[16384]{0}', space=vmem, size = 0x4000, scoped, tag = 'output window, operand 0']
    %19 = vsyncpa [#allocation3], 0
    %s20 = scalar_lea.sflag [#allocation3], 1
    %21 = vsyncpa %s20, 0
    %22 = vsyncpa [#allocation6], 0
    %23 = vsyncpa [#allocation4], 0
    %s24 = scalar_lea.sflag [#allocation4], 1
    %25 = vsyncpa %s24, 0
    loop: start=0, step=1, limit=4
    $region2: #{tpu_custom_call.1} parent=1 // loop_pre_header
      _
    $region3: #{tpu_custom_call.1} parent=1 // loop_header
      %s27 = sphi 0, %s31
      %p28 = scmp.ge.s32.totalorder %s27, 4
      %s37 = sphi 0, %s39
      %s40 = sphi 0, %s37
      %s41 = sphi 0, %s40
      %s57 = sphi 0, %s41
      %s61 = sphi 0, %s61
      %s63 = sphi 0, %s61
      %s64 = sphi 0, %s63
      %s78 = sphi 0, %s64
      %s82 = sphi 0, %s82
      %s84 = sphi 0, %s82
      %s85 = sphi 0, %s84
      %s99 = sphi 0, %s85
      %s103 = sphi 0, %s103
      %s105 = sphi 0, %s103
      %s106 = sphi 0, %s105
      %s120 = sphi 0, %s106
      %s124 = sphi 0, %s124
      %s126 = sphi 0, %s124
      %s127 = sphi 0, %s126
      %s141 = sphi 0, %s127
      %s145 = sphi 0, %s145
      %s147 = sphi 0, %s145
      %s148 = sphi 0, %s147
      %s162 = sphi 0, %s148
      %s166 = sphi 0, %s166
      %s168 = sphi 0, %s166
      %s169 = sphi 0, %s168
      %s183 = sphi 0, %s169
      %s187 = sphi 0, %s187
      %s189 = sphi 0, %s187
      %s190 = sphi 0, %s189
      %s204 = sphi 0, %s190
      %s208 = sphi 0, %s208
      %s210 = sphi 0, %s208
      %s211 = sphi 0, %s210
      %s225 = sphi 0, %s211
      %s229 = sphi 0, %s229
      %s231 = sphi 0, %s229
      %s232 = sphi 0, %s231
      %s246 = sphi 0, %s232
      %s250 = sphi 0, %s250
      %s252 = sphi 0, %s250
      %s253 = sphi 0, %s252
      %s267 = sphi 0, %s253
      %s271 = sphi 0, %s271
      %s273 = sphi 0, %s271
      %s274 = sphi 0, %s273
      %s288 = sphi 0, %s274
      %s292 = sphi 0, %s292
      %s294 = sphi 0, %s292
      %s295 = sphi 0, %s294
      %s309 = sphi 0, %s295
      %s313 = sphi 0, %s313
      %s315 = sphi 0, %s313
      %s316 = sphi 0, %s315
      %s330 = sphi 0, %s316
      %s336 = sphi 0, %s338
      %s339 = sphi 0, %s336
      %s340 = sphi 0, %s339
      %s356 = sphi 0, %s340
    $region4: #{tpu_custom_call.1} parent=1 // loop_header_branch
      %30 = sbr.rel (%p28) target = $region8
    $region5: #{tpu_custom_call.1} parent=1 // loop_body
      %s32 = ssub.s32 %s27, 1
      %s33 = ssub.s32 %s27, 2
      %s34 = sadd.s32 %s27, 1
      %s35 = ssub.s32 %s27, %s34
      %p36 = scmp.eq.s32.totalorder %s35, 0
      %s38 = sadd.s32 %s37, 1
      %s39 = scalar_select %p36, %s37, %s38
      %p42 = pneg %p36
      %p43 = scmp.eq.s32.totalorder %s27, 1
      %p44 = por %p42, %p43
      %p45 = scmp.ne.s32.totalorder %s37, %s40
      %p46 = scmp.eq.s32.totalorder %s27, 0
      %p47 = por %p45, %p46
      %p48 = scmp.ne.s32.totalorder %s37, %s40
      %p49 = scmp.eq.s32.totalorder %s32, 1
      %p50 = por %p48, %p49
      %p51 = scmp.ne.s32.totalorder %s40, %s41
      %p52 = scmp.eq.s32.totalorder %s32, 0
      %p53 = por %p51, %p52
      %p54 = scmp.ne.s32.totalorder %s40, %s41
      %p55 = scmp.eq.s32.totalorder %s33, 1
      %p56 = por %p54, %p55
      %p58 = scmp.ne.s32.totalorder %s41, %s57
      %p59 = scmp.eq.s32.totalorder %s33, 0
      %p60 = por %p58, %p59
      %s62 = sadd.s32 %s61, 1
      %p65 = scmp.eq.s32.totalorder %s27, 1
      %p66 = scmp.ne.s32.totalorder %s61, %s63
      %p67 = scmp.eq.s32.totalorder %s27, 0
      %p68 = por %p66, %p67
      %p69 = scmp.ne.s32.totalorder %s61, %s63
      %p70 = scmp.eq.s32.totalorder %s32, 1
      %p71 = por %p69, %p70
      %p72 = scmp.ne.s32.totalorder %s63, %s64
      %p73 = scmp.eq.s32.totalorder %s32, 0
      %p74 = por %p72, %p73
      %p75 = scmp.ne.s32.totalorder %s63, %s64
      %p76 = scmp.eq.s32.totalorder %s33, 1
      %p77 = por %p75, %p76
      %p79 = scmp.ne.s32.totalorder %s64, %s78
      %p80 = scmp.eq.s32.totalorder %s33, 0
      %p81 = por %p79, %p80
      %s83 = sadd.s32 %s82, 1
      %p86 = scmp.eq.s32.totalorder %s27, 1
      %p87 = scmp.ne.s32.totalorder %s82, %s84
      %p88 = scmp.eq.s32.totalorder %s27, 0
      %p89 = por %p87, %p88
      %p90 = scmp.ne.s32.totalorder %s82, %s84
      %p91 = scmp.eq.s32.totalorder %s32, 1
      %p92 = por %p90, %p91
      %p93 = scmp.ne.s32.totalorder %s84, %s85
      %p94 = scmp.eq.s32.totalorder %s32, 0
      %p95 = por %p93, %p94
      %p96 = scmp.ne.s32.totalorder %s84, %s85
      %p97 = scmp.eq.s32.totalorder %s33, 1
      %p98 = por %p96, %p97
      %p100 = scmp.ne.s32.totalorder %s85, %s99
      %p101 = scmp.eq.s32.totalorder %s33, 0
      %p102 = por %p100, %p101
      %s104 = sadd.s32 %s103, 1
      %p107 = scmp.eq.s32.totalorder %s27, 1
      %p108 = scmp.ne.s32.totalorder %s103, %s105
      %p109 = scmp.eq.s32.totalorder %s27, 0
      %p110 = por %p108, %p109
      %p111 = scmp.ne.s32.totalorder %s103, %s105
      %p112 = scmp.eq.s32.totalorder %s32, 1
      %p113 = por %p111, %p112
      %p114 = scmp.ne.s32.totalorder %s105, %s106
      %p115 = scmp.eq.s32.totalorder %s32, 0
      %p116 = por %p114, %p115
      %p117 = scmp.ne.s32.totalorder %s105, %s106
      %p118 = scmp.eq.s32.totalorder %s33, 1
      %p119 = por %p117, %p118
      %p121 = scmp.ne.s32.totalorder %s106, %s120
      %p122 = scmp.eq.s32.totalorder %s33, 0
      %p123 = por %p121, %p122
      %s125 = sadd.s32 %s124, 1
      %p128 = scmp.eq.s32.totalorder %s27, 1
      %p129 = scmp.ne.s32.totalorder %s124, %s126
      %p130 = scmp.eq.s32.totalorder %s27, 0
      %p131 = por %p129, %p130
      %p132 = scmp.ne.s32.totalorder %s124, %s126
      %p133 = scmp.eq.s32.totalorder %s32, 1
      %p134 = por %p132, %p133
      %p135 = scmp.ne.s32.totalorder %s126, %s127
      %p136 = scmp.eq.s32.totalorder %s32, 0
      %p137 = por %p135, %p136
      %p138 = scmp.ne.s32.totalorder %s126, %s127
      %p139 = scmp.eq.s32.totalorder %s33, 1
      %p140 = por %p138, %p139
      %p142 = scmp.ne.s32.totalorder %s127, %s141
      %p143 = scmp.eq.s32.totalorder %s33, 0
      %p144 = por %p142, %p143
      %s146 = sadd.s32 %s145, 1
      %p149 = scmp.eq.s32.totalorder %s27, 1
      %p150 = scmp.ne.s32.totalorder %s145, %s147
      %p151 = scmp.eq.s32.totalorder %s27, 0
      %p152 = por %p150, %p151
      %p153 = scmp.ne.s32.totalorder %s145, %s147
      %p154 = scmp.eq.s32.totalorder %s32, 1
      %p155 = por %p153, %p154
      %p156 = scmp.ne.s32.totalorder %s147, %s148
      %p157 = scmp.eq.s32.totalorder %s32, 0
      %p158 = por %p156, %p157
      %p159 = scmp.ne.s32.totalorder %s147, %s148
      %p160 = scmp.eq.s32.totalorder %s33, 1
      %p161 = por %p159, %p160
      %p163 = scmp.ne.s32.totalorder %s148, %s162
      %p164 = scmp.eq.s32.totalorder %s33, 0
      %p165 = por %p163, %p164
      %s167 = sadd.s32 %s166, 1
      %p170 = scmp.eq.s32.totalorder %s27, 1
      %p171 = scmp.ne.s32.totalorder %s166, %s168
      %p172 = scmp.eq.s32.totalorder %s27, 0
      %p173 = por %p171, %p172
      %p174 = scmp.ne.s32.totalorder %s166, %s168
      %p175 = scmp.eq.s32.totalorder %s32, 1
      %p176 = por %p174, %p175
      %p177 = scmp.ne.s32.totalorder %s168, %s169
      %p178 = scmp.eq.s32.totalorder %s32, 0
      %p179 = por %p177, %p178
      %p180 = scmp.ne.s32.totalorder %s168, %s169
      %p181 = scmp.eq.s32.totalorder %s33, 1
      %p182 = por %p180, %p181
      %p184 = scmp.ne.s32.totalorder %s169, %s183
      %p185 = scmp.eq.s32.totalorder %s33, 0
      %p186 = por %p184, %p185
      %s188 = sadd.s32 %s187, 1
      %p191 = scmp.eq.s32.totalorder %s27, 1
      %p192 = scmp.ne.s32.totalorder %s187, %s189
      %p193 = scmp.eq.s32.totalorder %s27, 0
      %p194 = por %p192, %p193
      %p195 = scmp.ne.s32.totalorder %s187, %s189
      %p196 = scmp.eq.s32.totalorder %s32, 1
      %p197 = por %p195, %p196
      %p198 = scmp.ne.s32.totalorder %s189, %s190
      %p199 = scmp.eq.s32.totalorder %s32, 0
      %p200 = por %p198, %p199
      %p201 = scmp.ne.s32.totalorder %s189, %s190
      %p202 = scmp.eq.s32.totalorder %s33, 1
      %p203 = por %p201, %p202
      %p205 = scmp.ne.s32.totalorder %s190, %s204
      %p206 = scmp.eq.s32.totalorder %s33, 0
      %p207 = por %p205, %p206
      %s209 = sadd.s32 %s208, 1
      %p212 = scmp.eq.s32.totalorder %s27, 1
      %p213 = scmp.ne.s32.totalorder %s208, %s210
      %p214 = scmp.eq.s32.totalorder %s27, 0
      %p215 = por %p213, %p214
      %p216 = scmp.ne.s32.totalorder %s208, %s210
      %p217 = scmp.eq.s32.totalorder %s32, 1
      %p218 = por %p216, %p217
      %p219 = scmp.ne.s32.totalorder %s210, %s211
      %p220 = scmp.eq.s32.totalorder %s32, 0
      %p221 = por %p219, %p220
      %p222 = scmp.ne.s32.totalorder %s210, %s211
      %p223 = scmp.eq.s32.totalorder %s33, 1
      %p224 = por %p222, %p223
      %p226 = scmp.ne.s32.totalorder %s211, %s225
      %p227 = scmp.eq.s32.totalorder %s33, 0
      %p228 = por %p226, %p227
      %s230 = sadd.s32 %s229, 1
      %p233 = scmp.eq.s32.totalorder %s27, 1
      %p234 = scmp.ne.s32.totalorder %s229, %s231
      %p235 = scmp.eq.s32.totalorder %s27, 0
      %p236 = por %p234, %p235
      %p237 = scmp.ne.s32.totalorder %s229, %s231
      %p238 = scmp.eq.s32.totalorder %s32, 1
      %p239 = por %p237, %p238
      %p240 = scmp.ne.s32.totalorder %s231, %s232
      %p241 = scmp.eq.s32.totalorder %s32, 0
      %p242 = por %p240, %p241
      %p243 = scmp.ne.s32.totalorder %s231, %s232
      %p244 = scmp.eq.s32.totalorder %s33, 1
      %p245 = por %p243, %p244
      %p247 = scmp.ne.s32.totalorder %s232, %s246
      %p248 = scmp.eq.s32.totalorder %s33, 0
      %p249 = por %p247, %p248
      %s251 = sadd.s32 %s250, 1
      %p254 = scmp.eq.s32.totalorder %s27, 1
      %p255 = scmp.ne.s32.totalorder %s250, %s252
      %p256 = scmp.eq.s32.totalorder %s27, 0
      %p257 = por %p255, %p256
      %p258 = scmp.ne.s32.totalorder %s250, %s252
      %p259 = scmp.eq.s32.totalorder %s32, 1
      %p260 = por %p258, %p259
      %p261 = scmp.ne.s32.totalorder %s252, %s253
      %p262 = scmp.eq.s32.totalorder %s32, 0
      %p263 = por %p261, %p262
      %p264 = scmp.ne.s32.totalorder %s252, %s253
      %p265 = scmp.eq.s32.totalorder %s33, 1
      %p266 = por %p264, %p265
      %p268 = scmp.ne.s32.totalorder %s253, %s267
      %p269 = scmp.eq.s32.totalorder %s33, 0
      %p270 = por %p268, %p269
      %s272 = sadd.s32 %s271, 1
      %p275 = scmp.eq.s32.totalorder %s27, 1
      %p276 = scmp.ne.s32.totalorder %s271, %s273
      %p277 = scmp.eq.s32.totalorder %s27, 0
      %p278 = por %p276, %p277
      %p279 = scmp.ne.s32.totalorder %s271, %s273
      %p280 = scmp.eq.s32.totalorder %s32, 1
      %p281 = por %p279, %p280
      %p282 = scmp.ne.s32.totalorder %s273, %s274
      %p283 = scmp.eq.s32.totalorder %s32, 0
      %p284 = por %p282, %p283
      %p285 = scmp.ne.s32.totalorder %s273, %s274
      %p286 = scmp.eq.s32.totalorder %s33, 1
      %p287 = por %p285, %p286
      %p289 = scmp.ne.s32.totalorder %s274, %s288
      %p290 = scmp.eq.s32.totalorder %s33, 0
      %p291 = por %p289, %p290
      %s293 = sadd.s32 %s292, 1
      %p296 = scmp.eq.s32.totalorder %s27, 1
      %p297 = scmp.ne.s32.totalorder %s292, %s294
      %p298 = scmp.eq.s32.totalorder %s27, 0
      %p299 = por %p297, %p298
      %p300 = scmp.ne.s32.totalorder %s292, %s294
      %p301 = scmp.eq.s32.totalorder %s32, 1
      %p302 = por %p300, %p301
      %p303 = scmp.ne.s32.totalorder %s294, %s295
      %p304 = scmp.eq.s32.totalorder %s32, 0
      %p305 = por %p303, %p304
      %p306 = scmp.ne.s32.totalorder %s294, %s295
      %p307 = scmp.eq.s32.totalorder %s33, 1
      %p308 = por %p306, %p307
      %p310 = scmp.ne.s32.totalorder %s295, %s309
      %p311 = scmp.eq.s32.totalorder %s33, 0
      %p312 = por %p310, %p311
      %s314 = sadd.s32 %s313, 1
      %p317 = scmp.eq.s32.totalorder %s27, 1
      %p318 = scmp.ne.s32.totalorder %s313, %s315
      %p319 = scmp.eq.s32.totalorder %s27, 0
      %p320 = por %p318, %p319
      %p321 = scmp.ne.s32.totalorder %s313, %s315
      %p322 = scmp.eq.s32.totalorder %s32, 1
      %p323 = por %p321, %p322
      %p324 = scmp.ne.s32.totalorder %s315, %s316
      %p325 = scmp.eq.s32.totalorder %s32, 0
      %p326 = por %p324, %p325
      %p327 = scmp.ne.s32.totalorder %s315, %s316
      %p328 = scmp.eq.s32.totalorder %s33, 1
      %p329 = por %p327, %p328
      %p331 = scmp.ne.s32.totalorder %s316, %s330
      %p332 = scmp.eq.s32.totalorder %s33, 0
      %p333 = por %p331, %p332
      %s334 = ssub.s32 %s27, %s34
      %p335 = scmp.eq.s32.totalorder %s334, 0
      %s337 = sadd.s32 %s336, 1
      %s338 = scalar_select %p335, %s336, %s337
      %p341 = pneg %p335
      %p342 = scmp.eq.s32.totalorder %s27, 1
      %p343 = por %p341, %p342
      %p344 = scmp.ne.s32.totalorder %s336, %s339
      %p345 = scmp.eq.s32.totalorder %s27, 0
      %p346 = por %p344, %p345
      %p347 = scmp.ne.s32.totalorder %s336, %s339
      %p348 = scmp.eq.s32.totalorder %s32, 1
      %p349 = por %p347, %p348
      %p350 = scmp.ne.s32.totalorder %s339, %s340
      %p351 = scmp.eq.s32.totalorder %s32, 0
      %p352 = por %p350, %p351
      %p353 = scmp.ne.s32.totalorder %s339, %s340
      %p354 = scmp.eq.s32.totalorder %s33, 1
      %p355 = por %p353, %p354
      %p357 = scmp.ne.s32.totalorder %s340, %s356
      %p358 = scmp.eq.s32.totalorder %s33, 0
      %p359 = por %p357, %p358
      %p360 = scmp.le.s32.totalorder 1, %s27
      %p361 = scmp.lt.s32.totalorder %s27, 3
      %p362 = pnand %p360, %p361
      %p363 = pneg %p362
      // Predicated region
      $region9: #{tpu_custom_call.1} parent=5 // pred_check
        _
      $region10: #{tpu_custom_call.1} parent=5 // pred_check_branch
        %365 = sbr.rel (%p362) target = $region12
      $region11: #{tpu_custom_call.1} parent=5 // pred_region
        %s366 = ssub.s32 %s27, 1
        // Predicated region
        $region13: #{tpu_custom_call.1} parent=11 // pred_check
          %p367 = pneg %p74
        $region14: #{tpu_custom_call.1} parent=11 // pred_check_branch
          %369 = sbr.rel (%p367) target = $region16
        $region15: #{tpu_custom_call.1} parent=11 // pred_region
          %s371 = ssub.s32 2048, 2048
          %372 = vsyncadd [#allocation6], %s371
          %s373 = sshll.u32 [#allocation5], 4
          %s374 = int_to_ptr.vmem [resolvable:$true] %s373
          %379 = dma.hbm_to_vmem [thread:$0]  %s1, 2048, %s374, [#allocation6], 128, 128, 8
        $region16: #{tpu_custom_call.1} parent=11 // pred_fallthru
          _
        // Predicated region
        $region17: #{tpu_custom_call.1} parent=11 // pred_check
          %p380 = pneg %p95
        $region18: #{tpu_custom_call.1} parent=11 // pred_check_branch
          %382 = sbr.rel (%p380) target = $region20
        $region19: #{tpu_custom_call.1} parent=11 // pred_region
          _
        $region20: #{tpu_custom_call.1} parent=11 // pred_fallthru
          _
        // Predicated region
        $region21: #{tpu_custom_call.1} parent=11 // pred_check
          %p383 = pneg %p116
        $region22: #{tpu_custom_call.1} parent=11 // pred_check_branch
          %385 = sbr.rel (%p383) target = $region24
        $region23: #{tpu_custom_call.1} parent=11 // pred_region
          _
        $region24: #{tpu_custom_call.1} parent=11 // pred_fallthru
          _
        // Predicated region
        $region25: #{tpu_custom_call.1} parent=11 // pred_check
          %p386 = pneg %p137
        $region26: #{tpu_custom_call.1} parent=11 // pred_check_branch
          %388 = sbr.rel (%p386) target = $region28
        $region27: #{tpu_custom_call.1} parent=11 // pred_region
          _
        $region28: #{tpu_custom_call.1} parent=11 // pred_fallthru
          _
        // Predicated region
        $region29: #{tpu_custom_call.1} parent=11 // pred_check
          %p389 = pneg %p158
        $region30: #{tpu_custom_call.1} parent=11 // pred_check_branch
          %391 = sbr.rel (%p389) target = $region32
        $region31: #{tpu_custom_call.1} parent=11 // pred_region
          _
        $region32: #{tpu_custom_call.1} parent=11 // pred_fallthru
          _
        // Predicated region
        $region33: #{tpu_custom_call.1} parent=11 // pred_check
          %p392 = pneg %p179
        $region34: #{tpu_custom_call.1} parent=11 // pred_check_branch
          %394 = sbr.rel (%p392) target = $region36
        $region35: #{tpu_custom_call.1} parent=11 // pred_region
          _
        $region36: #{tpu_custom_call.1} parent=11 // pred_fallthru
          _
        // Predicated region
        $region37: #{tpu_custom_call.1} parent=11 // pred_check
          %p395 = pneg %p200
        $region38: #{tpu_custom_call.1} parent=11 // pred_check_branch
          %397 = sbr.rel (%p395) target = $region40
        $region39: #{tpu_custom_call.1} parent=11 // pred_region
          _
        $region40: #{tpu_custom_call.1} parent=11 // pred_fallthru
          _
        // Predicated region
        $region41: #{tpu_custom_call.1} parent=11 // pred_check
          %p398 = pneg %p221
        $region42: #{tpu_custom_call.1} parent=11 // pred_check_branch
          %400 = sbr.rel (%p398) target = $region44
        $region43: #{tpu_custom_call.1} parent=11 // pred_region
          _
        $region44: #{tpu_custom_call.1} parent=11 // pred_fallthru
          _
        // Predicated region
        $region45: #{tpu_custom_call.1} parent=11 // pred_check
          %p401 = pneg %p242
        $region46: #{tpu_custom_call.1} parent=11 // pred_check_branch
          %403 = sbr.rel (%p401) target = $region48
        $region47: #{tpu_custom_call.1} parent=11 // pred_region
          _
        $region48: #{tpu_custom_call.1} parent=11 // pred_fallthru
          _
        // Predicated region
        $region49: #{tpu_custom_call.1} parent=11 // pred_check
          %p404 = pneg %p263
        $region50: #{tpu_custom_call.1} parent=11 // pred_check_branch
          %406 = sbr.rel (%p404) target = $region52
        $region51: #{tpu_custom_call.1} parent=11 // pred_region
          _
        $region52: #{tpu_custom_call.1} parent=11 // pred_fallthru
          _
        // Predicated region
        $region53: #{tpu_custom_call.1} parent=11 // pred_check
          %p407 = pneg %p284
        $region54: #{tpu_custom_call.1} parent=11 // pred_check_branch
          %409 = sbr.rel (%p407) target = $region56
        $region55: #{tpu_custom_call.1} parent=11 // pred_region
          _
        $region56: #{tpu_custom_call.1} parent=11 // pred_fallthru
          _
        // Predicated region
        $region57: #{tpu_custom_call.1} parent=11 // pred_check
          %p410 = pneg %p305
        $region58: #{tpu_custom_call.1} parent=11 // pred_check_branch
          %412 = sbr.rel (%p410) target = $region60
        $region59: #{tpu_custom_call.1} parent=11 // pred_region
          %s414 = ssub.s32 2048, 2048
          %415 = vsyncadd [#allocation6], %s414
          %s416 = sshll.u32 [#allocation7], 4
          %s417 = int_to_ptr.vmem [resolvable:$true] %s416
          %422 = dma.hbm_to_vmem [thread:$0]  %s12, 2048, %s417, [#allocation6], 64, 64, 4
        $region60: #{tpu_custom_call.1} parent=11 // pred_fallthru
          _
        // Predicated region
        $region61: #{tpu_custom_call.1} parent=11 // pred_check
          %p423 = pneg %p326
        $region62: #{tpu_custom_call.1} parent=11 // pred_check_branch
          %425 = sbr.rel (%p423) target = $region64
        $region63: #{tpu_custom_call.1} parent=11 // pred_region
          _
        $region64: #{tpu_custom_call.1} parent=11 // pred_fallthru
          _
      $region12: #{tpu_custom_call.1} parent=5 // pred_fallthru
        _
      %p426 = scmp.lt.s32.totalorder %s27, 2
      // Predicated region
      $region65: #{tpu_custom_call.1} parent=5 // pred_check
        %p427 = pneg %p426
      $region66: #{tpu_custom_call.1} parent=5 // pred_check_branch
        %429 = sbr.rel (%p427) target = $region68
      $region67: #{tpu_custom_call.1} parent=5 // pred_region
        // Predicated region
        $region69: #{tpu_custom_call.1} parent=67 // pred_check
          %p430 = pneg %p47
        $region70: #{tpu_custom_call.1} parent=67 // pred_check_branch
          %432 = sbr.rel (%p430) target = $region72
        $region71: #{tpu_custom_call.1} parent=67 // pred_region
          %s433 = sand.u32 %s37, 1
          %s434 = scalar_lea.sflag [#allocation3], %s433
          %s435 = sand.u32 %s37, 1
          %s436 = smul.addr %s435, 16
          %s437 = scalar_lea.vmem [#allocation2], %s436
          %s439 = ssub.s32 256, 256
          %440 = vsyncadd %s434, %s439
          %s441 = smul.addr %s27, 2
          %s442 = smul.addr %s441, 128
          %s443 = scalar_lea.hbm %s0, %s442
          %s444 = sshll.u32 %s437, 4
          %s445 = int_to_ptr.vmem [resolvable:$true] %s444
          %450 = dma.hbm_to_vmem [thread:$0]  %s443, 256, %s445, %s434, 128, 128, 8
        $region72: #{tpu_custom_call.1} parent=67 // pred_fallthru
          _
      $region68: #{tpu_custom_call.1} parent=5 // pred_fallthru
        _
      %p451 = scmp.le.s32.totalorder 1, %s27
      %p452 = scmp.lt.s32.totalorder %s27, 3
      %p453 = pnand %p451, %p452
      %p454 = pneg %p453
      // Predicated region
      $region73: #{tpu_custom_call.1} parent=5 // pred_check
        _
      $region74: #{tpu_custom_call.1} parent=5 // pred_check_branch
        %456 = sbr.rel (%p453) target = $region76
      $region75: #{tpu_custom_call.1} parent=5 // pred_region
        %s457 = ssub.s32 %s27, 1
        %s458 = sand.u32 %s40, 1
        %s459 = scalar_lea.sflag [#allocation3], %s458
        %s460 = sand.u32 %s40, 1
        %s461 = smul.addr %s460, 16
        %s462 = scalar_lea.vmem [#allocation2], %s461
        // Predicated region
        $region77: #{tpu_custom_call.1} parent=75 // pred_check
          %p463 = pneg %p53
        $region78: #{tpu_custom_call.1} parent=75 // pred_check_branch
          %465 = sbr.rel (%p463) target = $region80
        $region79: #{tpu_custom_call.1} parent=75 // pred_region
          %466 = dma.done %s459, 256
        $region80: #{tpu_custom_call.1} parent=75 // pred_fallthru
          _
        // Predicated region
        $region81: #{tpu_custom_call.1} parent=75 // pred_check
          %p467 = pneg %p74
        $region82: #{tpu_custom_call.1} parent=75 // pred_check_branch
          %469 = sbr.rel (%p467) target = $region84
        $region83: #{tpu_custom_call.1} parent=75 // pred_region
          %470 = dma.done [#allocation6], 2048
        $region84: #{tpu_custom_call.1} parent=75 // pred_fallthru
          _
        // Predicated region
        $region85: #{tpu_custom_call.1} parent=75 // pred_check
          %p471 = pneg %p305
        $region86: #{tpu_custom_call.1} parent=75 // pred_check_branch
          %473 = sbr.rel (%p471) target = $region88
        $region87: #{tpu_custom_call.1} parent=75 // pred_region
          %474 = dma.done [#allocation6], 2048
        $region88: #{tpu_custom_call.1} parent=75 // pred_fallthru
          _
        %s475 = sand.u32 %s40, 1
        %s476 = scalar_lea.sflag [#allocation3], %s475
        %s477 = sand.u32 %s40, 1
        %s478 = smul.addr %s477, 16
        %s479 = scalar_lea.vmem [#allocation2], %s478
        %p480 = pneg %p53
        %p481 = pneg %p50
        %p482 = pneg %p74
        %p483 = pneg %p71
        %p484 = pneg %p95
        %p485 = pneg %p92
        %p486 = pneg %p116
        %p487 = pneg %p113
        %p488 = pneg %p137
        %p489 = pneg %p134
        %p490 = pneg %p158
        %p491 = pneg %p155
        %p492 = pneg %p179
        %p493 = pneg %p176
        %p494 = pneg %p200
        %p495 = pneg %p197
        %p496 = pneg %p221
        %p497 = pneg %p218
        %p498 = pneg %p242
        %p499 = pneg %p239
        %p500 = pneg %p263
        %p501 = pneg %p260
        %p502 = pneg %p284
        %p503 = pneg %p281
        %p504 = pneg %p305
        %p505 = pneg %p302
        %p506 = pneg %p326
        %p507 = pneg %p323
        %p508 = pneg %p352
        %p509 = pneg %p349
        %s510 = sand.u32 %s339, 1
        %s511 = scalar_lea.sflag [#allocation4], %s510
        %s512 = sand.u32 %s339, 1
        %s513 = smul.addr %s512, 16
        %s514 = scalar_lea.vmem [#allocation8], %s513
        %v516 = vld [vmem:[%s462] sm:$0xff]
        %v517 = vld [vmem:[%s462 + $0x8] sm:$0xff]
        %v518 = vld [vmem:[#allocation5] sm:$0xff]
        %v519 = vld [vmem:[#allocation5 + $0x8] sm:$0xff]
        %v520 = vld [vmem:[#allocation5 + $0x10] sm:$0xff]
        %v521 = vld [vmem:[#allocation5 + $0x18] sm:$0xff]
        %v522 = vld [vmem:[#allocation5 + $0x20] sm:$0xff]
        %v523 = vld [vmem:[#allocation5 + $0x28] sm:$0xff]
        %v524 = vld [vmem:[#allocation5 + $0x30] sm:$0xff]
        %v525 = vld [vmem:[#allocation5 + $0x38] sm:$0xff]
        %v526 = vld [vmem:[#allocation5 + $0x40] sm:$0xff]
        %v527 = vld [vmem:[#allocation5 + $0x48] sm:$0xff]
        %v528 = vld [vmem:[#allocation5 + $0x50] sm:$0xff]
        %v529 = vld [vmem:[#allocation5 + $0x58] sm:$0xff]
        %v530 = vld [vmem:[#allocation5 + $0x60] sm:$0xff]
        %v531 = vld [vmem:[#allocation5 + $0x68] sm:$0xff]
        %v532 = vld [vmem:[#allocation5 + $0x70] sm:$0xff]
        %v533 = vld [vmem:[#allocation5 + $0x78] sm:$0xff]
        %v534 = vld [vmem:[%s2] sm:$0x1]
        %v535 = vld [vmem:[%s3] sm:$0x1]
        %536 = vmatprep.subr.mxu0 0.0
        %537 = vmatpush1.msra.mxu0 %v518
        %538 = vmatprep.subr.mxu0 0.0
        %539 = vmatpush1.msra.mxu0 %v519
        %540 = vmatprep.subr.mxu0 0.0
        %541 = vmatpush1.msra.mxu0 %v520
        %542 = vmatprep.subr.mxu0 0.0
        %543 = vmatpush1.msra.mxu0 %v521
        %544 = vmatprep.subr.mxu0 0.0
        %545 = vmatpush1.msra.mxu0 %v522
        %546 = vmatprep.subr.mxu0 0.0
        %547 = vmatpush1.msra.mxu0 %v523
        %548 = vmatprep.subr.mxu0 0.0
        %549 = vmatpush1.msra.mxu0 %v524
        %550 = vmatprep.subr.mxu0 0.0
        %551 = vmatpush1.msra.mxu0 %v525
        %552 = vmatprep.subr.mxu0 0.0
        %553 = vmatpush1.msra.mxu0 %v526
        %554 = vmatprep.subr.mxu0 0.0
        %555 = vmatpush1.msra.mxu0 %v527
        %556 = vmatprep.subr.mxu0 0.0
        %557 = vmatpush1.msra.mxu0 %v528
        %558 = vmatprep.subr.mxu0 0.0
        %559 = vmatpush1.msra.mxu0 %v529
        %560 = vmatprep.subr.mxu0 0.0
        %561 = vmatpush1.msra.mxu0 %v530
        %562 = vmatprep.subr.mxu0 0.0
        %563 = vmatpush1.msra.mxu0 %v531
        %564 = vmatprep.subr.mxu0 0.0
        %565 = vmatpush1.msra.mxu0 %v532
        %566 = vmatprep.subr.mxu0 0.0
        %567 = vmatpush1.msra.mxu0 %v533
        %568 = vmatprep.subr.mxu0 0.0
        %569 = vmatpush1.msra.mxu0 0.0
        %570 = vmatprep.subr.mxu0 0.0
        %571 = vmatpush1.msra.mxu0 0.0
        %572 = vmatprep.subr.mxu0 0.0
        %573 = vmatpush1.msra.mxu0 0.0
        %574 = vmatprep.subr.mxu0 0.0
        %575 = vmatpush1.msra.mxu0 0.0
        %576 = vmatprep.subr.mxu0 0.0
        %577 = vmatpush1.msra.mxu0 0.0
        %578 = vmatprep.subr.mxu0 0.0
        %579 = vmatpush1.msra.mxu0 0.0
        %580 = vmatprep.subr.mxu0 0.0
        %581 = vmatpush1.msra.mxu0 0.0
        %582 = vmatprep.subr.mxu0 0.0
        %583 = vmatpush1.msra.mxu0 0.0
        %584 = vmatprep.subr.mxu0 0.0
        %585 = vmatpush1.msra.mxu0 0.0
        %586 = vmatprep.subr.mxu0 0.0
        %587 = vmatpush1.msra.mxu0 0.0
        %588 = vmatprep.subr.mxu0 0.0
        %589 = vmatpush1.msra.mxu0 0.0
        %590 = vmatprep.subr.mxu0 0.0
        %591 = vmatpush1.msra.mxu0 0.0
        %592 = vmatprep.subr.mxu0 0.0
        %593 = vmatpush1.msra.mxu0 0.0
        %594 = vmatprep.subr.mxu0 0.0
        %595 = vmatpush1.msra.mxu0 0.0
        %596 = vmatprep.subr.mxu0 0.0
        %597 = vmatpush1.msra.mxu0 0.0
        %598 = vmatprep.subr.mxu0 0.0
        %599 = vmatpush1.msra.mxu0 0.0
        %600 = vmatprep.mubr.f32.mxu0 0.0
        %601 = vmatmul.mubr.f32.gmra.mrb[0].mxu0 %v516
        %v602 = vpop.f32.mrb[0].mxu0
        %v603 = vadd.f32 0.0, %v602
        %v604 = vpop.f32.mrb[0].mxu0
        %605 = vmatprep.mubr.f32.mxu0 0.0
        %606 = vmatmul.mubr.f32.gmra.mrb[0].mxu0 %v517
        %v607 = vpop.f32.mrb[0].mxu0
        %v608 = vadd.f32 0.0, %v607
        %v609 = vpop.f32.mrb[0].mxu0
        %610 = vdwg.mxu0
        %v611 = vsub.f32 %v516, %v603
        %v612 = vsub.f32 %v517, %v608
        %v613 = vmul.f32 %v611, %v611
        %v614 = vmul.f32 %v612, %v612
        %615 = vmatprep.subr.mxu0 0.0
        %616 = vmatpush1.msra.mxu0 %v518
        %617 = vmatprep.subr.mxu0 0.0
        %618 = vmatpush1.msra.mxu0 %v519
        %619 = vmatprep.subr.mxu0 0.0
        %620 = vmatpush1.msra.mxu0 %v520
        %621 = vmatprep.subr.mxu0 0.0
        %622 = vmatpush1.msra.mxu0 %v521
        %623 = vmatprep.subr.mxu0 0.0
        %624 = vmatpush1.msra.mxu0 %v522
        %625 = vmatprep.subr.mxu0 0.0
        %626 = vmatpush1.msra.mxu0 %v523
        %627 = vmatprep.subr.mxu0 0.0
        %628 = vmatpush1.msra.mxu0 %v524
        %629 = vmatprep.subr.mxu0 0.0
        %630 = vmatpush1.msra.mxu0 %v525
        %631 = vmatprep.subr.mxu0 0.0
        %632 = vmatpush1.msra.mxu0 %v526
        %633 = vmatprep.subr.mxu0 0.0
        %634 = vmatpush1.msra.mxu0 %v527
        %635 = vmatprep.subr.mxu0 0.0
        %636 = vmatpush1.msra.mxu0 %v528
        %637 = vmatprep.subr.mxu0 0.0
        %638 = vmatpush1.msra.mxu0 %v529
        %639 = vmatprep.subr.mxu0 0.0
        %640 = vmatpush1.msra.mxu0 %v530
        %641 = vmatprep.subr.mxu0 0.0
        %642 = vmatpush1.msra.mxu0 %v531
        %643 = vmatprep.subr.mxu0 0.0
        %644 = vmatpush1.msra.mxu0 %v532
        %645 = vmatprep.subr.mxu0 0.0
        %646 = vmatpush1.msra.mxu0 %v533
        %647 = vmatprep.subr.mxu0 0.0
        %648 = vmatpush1.msra.mxu0 0.0
        %649 = vmatprep.subr.mxu0 0.0
        %650 = vmatpush1.msra.mxu0 0.0
        %651 = vmatprep.subr.mxu0 0.0
        %652 = vmatpush1.msra.mxu0 0.0
        %653 = vmatprep.subr.mxu0 0.0
        %654 = vmatpush1.msra.mxu0 0.0
        %655 = vmatprep.subr.mxu0 0.0
        %656 = vmatpush1.msra.mxu0 0.0
        %657 = vmatprep.subr.mxu0 0.0
        %658 = vmatpush1.msra.mxu0 0.0
        %659 = vmatprep.subr.mxu0 0.0
        %660 = vmatpush1.msra.mxu0 0.0
        %661 = vmatprep.subr.mxu0 0.0
        %662 = vmatpush1.msra.mxu0 0.0
        %663 = vmatprep.subr.mxu0 0.0
        %664 = vmatpush1.msra.mxu0 0.0
        %665 = vmatprep.subr.mxu0 0.0
        %666 = vmatpush1.msra.mxu0 0.0
        %667 = vmatprep.subr.mxu0 0.0
        %668 = vmatpush1.msra.mxu0 0.0
        %669 = vmatprep.subr.mxu0 0.0
        %670 = vmatpush1.msra.mxu0 0.0
        %671 = vmatprep.subr.mxu0 0.0
        %672 = vmatpush1.msra.mxu0 0.0
        %673 = vmatprep.subr.mxu0 0.0
        %674 = vmatpush1.msra.mxu0 0.0
        %675 = vmatprep.subr.mxu0 0.0
        %676 = vmatpush1.msra.mxu0 0.0
        %677 = vmatprep.subr.mxu0 0.0
        %678 = vmatpush1.msra.mxu0 0.0
        %679 = vmatprep.mubr.f32.mxu0 0.0
        %680 = vmatmul.mubr.f32.gmra.mrb[0].mxu0 %v613
        %v681 = vpop.f32.mrb[0].mxu0
        %v682 = vadd.f32 1e-05, %v681
        %v683 = vpop.f32.mrb[0].mxu0
        %684 = vmatprep.mubr.f32.mxu0 0.0
        %685 = vmatmul.mubr.f32.gmra.mrb[0].mxu0 %v614
        %v686 = vpop.f32.mrb[0].mxu0
        %v687 = vadd.f32 1e-05, %v686
        %v688 = vpop.f32.mrb[0].mxu0
        %689 = vdwg.mxu0
        %v690 = vrsqrt.pop %v682
        %v691 = vrsqrt.pop %v687
        %v692 = vmul.f32 %v611, %v690
        %v693 = vmul.f32 %v612, %v691
        %v695 = vlaneseq
        %v696 = vshrl.u32 %v695, 7
        %v697 = vsub.s32 0, %v696
        %v698 = vrot.slane %v534, %v697
        %v700 = vmul.f32 %v692, %v698
        %v701 = vmul.f32 %v693, %v698
        %v703 = vlaneseq
        %v704 = vshrl.u32 %v703, 7
        %v705 = vsub.s32 0, %v704
        %v706 = vrot.slane %v535, %v705
        %v708 = vadd.f32 %v700, %v706
        %v709 = vadd.f32 %v701, %v706
        %v710 = vld [vmem:[%s4] sm:$0xf]
        %v711 = vld [vmem:[%s4 + $0x4] sm:$0xf]
        %v712 = vld [vmem:[%s4 + $0x8] sm:$0xf]
        %v713 = vld [vmem:[%s4 + $0xc] sm:$0xf]
        %v714 = vld [vmem:[%s4 + $0x10] sm:$0xf]
        %v715 = vld [vmem:[%s4 + $0x14] sm:$0xf]
        %v716 = vld [vmem:[%s4 + $0x18] sm:$0xf]
        %v717 = vld [vmem:[%s4 + $0x1c] sm:$0xf]
        %v718 = vpack.c.bf16 %v709, %v708
        %v719 = vld [vmem:[%s5] sm:$0xff]
        %v720 = vld [vmem:[%s5 + $0x8] sm:$0xff]
        %v721 = vld [vmem:[%s5 + $0x10] sm:$0xff]
        %v722 = vld [vmem:[%s5 + $0x18] sm:$0xff]
        %v723 = vld [vmem:[%s5 + $0x20] sm:$0xff]
        %v724 = vld [vmem:[%s5 + $0x28] sm:$0xff]
        %v725 = vld [vmem:[%s5 + $0x30] sm:$0xff]
        %v726 = vld [vmem:[%s5 + $0x38] sm:$0xff]
        %728 = vset.pattern.permute.xlu0 0
        %729 = vperm.xlu0 %728, %v719
        %v730 = vpop.permute.xlu0 %729
        %733 = vset.pattern.permute.xlu0 0
        %734 = vperm.xlu0 %733, %v720
        %v735 = vpop.permute.xlu0 %734
        %738 = vset.pattern.permute.xlu0 0
        %739 = vperm.xlu0 %738, %v721
        %v740 = vpop.permute.xlu0 %739
        %743 = vset.pattern.permute.xlu0 0
        %744 = vperm.xlu0 %743, %v722
        %v745 = vpop.permute.xlu0 %744
        %748 = vset.pattern.permute.xlu0 0
        %749 = vperm.xlu0 %748, %v723
        %v750 = vpop.permute.xlu0 %749
        %753 = vset.pattern.permute.xlu0 0
        %754 = vperm.xlu0 %753, %v724
        %v755 = vpop.permute.xlu0 %754
        %758 = vset.pattern.permute.xlu0 0
        %759 = vperm.xlu0 %758, %v725
        %v760 = vpop.permute.xlu0 %759
        %763 = vset.pattern.permute.xlu0 0
        %764 = vperm.xlu0 %763, %v726
        %v765 = vpop.permute.xlu0 %764
        %v775 = vunpack.c.l.b16 %v710
        %v776 = vunpack.c.l.b16 %v711
        %v777 = vunpack.c.l.b16 %v712
        %v778 = vunpack.c.l.b16 %v713
        %v779 = vunpack.c.l.b16 %v714
        %v780 = vunpack.c.l.b16 %v715
        %v781 = vunpack.c.l.b16 %v716
        %v782 = vunpack.c.l.b16 %v717
        %v783 = vpack.c.b16 %v776, %v775
        %v784 = vpack.c.b16 %v778, %v777
        %v785 = vpack.c.b16 %v780, %v779
        %v786 = vpack.c.b16 %v782, %v781
        %vm787 = vcmask 130048
        %v789 = vsel %vm787, %v783, 0
        %v792 = vsel %vm787, %v784, 0
        %v795 = vsel %vm787, %v785, 0
        %v798 = vsel %vm787, %v786, 0
        %800 = vmatprep.subr.bf16.mxu0 0
        %801 = vmatpush1.bf16.msra.mxu0 %v718
        %802 = vmatprep.subr.bf16.mxu0 0
        %803 = vmatpush1.bf16.msra.mxu0 0
        %804 = vmatprep.subr.bf16.mxu0 0
        %805 = vmatpush1.bf16.msra.mxu0 0
        %806 = vmatprep.subr.bf16.mxu0 0
        %807 = vmatpush1.bf16.msra.mxu0 0
        %808 = vmatprep.subr.bf16.mxu0 0
        %809 = vmatpush1.bf16.msra.mxu0 0
        %810 = vmatprep.subr.bf16.mxu0 0
        %811 = vmatpush1.bf16.msra.mxu0 0
        %812 = vmatprep.subr.bf16.mxu0 0
        %813 = vmatpush1.bf16.msra.mxu0 0
        %814 = vmatprep.subr.bf16.mxu0 0
        %815 = vmatpush1.bf16.msra.mxu0 0
        %816 = vmatprep.subr.bf16.mxu0 0
        %817 = vmatpush1.bf16.msra.mxu0 0
        %818 = vmatprep.subr.bf16.mxu0 0
        %819 = vmatpush1.bf16.msra.mxu0 0
        %820 = vmatprep.subr.bf16.mxu0 0
        %821 = vmatpush1.bf16.msra.mxu0 0
        %822 = vmatprep.subr.bf16.mxu0 0
        %823 = vmatpush1.bf16.msra.mxu0 0
        %824 = vmatprep.subr.bf16.mxu0 0
        %825 = vmatpush1.bf16.msra.mxu0 0
        %826 = vmatprep.subr.bf16.mxu0 0
        %827 = vmatpush1.bf16.msra.mxu0 0
        %828 = vmatprep.subr.bf16.mxu0 0
        %829 = vmatpush1.bf16.msra.mxu0 0
        %830 = vmatprep.subr.bf16.mxu0 0
        %831 = vmatpush1.bf16.msra.mxu0 0
        %832 = vmatprep.mubr.bf16.mxu0 0
        %833 = vmatmul.mubr.bf16.gmra.mrb[0].mxu0 %v789
        %v834 = vpop.f32.mrb[0].mxu0
        %v835 = vadd.f32 %v730, %v834
        %v836 = vpop.f32.mrb[0].mxu0
        %v837 = vpop.f32.mrb[0].mxu0
        %v838 = vadd.f32 %v735, %v837
        %v839 = vpop.f32.mrb[0].mxu0
        %840 = vmatprep.mubr.bf16.mxu0 0
        %841 = vmatmul.mubr.bf16.gmra.mrb[0].mxu0 %v792
        %v842 = vpop.f32.mrb[0].mxu0
        %v843 = vadd.f32 %v740, %v842
        %v844 = vpop.f32.mrb[0].mxu0
        %v845 = vpop.f32.mrb[0].mxu0
        %v846 = vadd.f32 %v745, %v845
        %v847 = vpop.f32.mrb[0].mxu0
        %848 = vmatprep.mubr.bf16.mxu0 0
        %849 = vmatmul.mubr.bf16.gmra.mrb[0].mxu0 %v795
        %v850 = vpop.f32.mrb[0].mxu0
        %v851 = vadd.f32 %v750, %v850
        %v852 = vpop.f32.mrb[0].mxu0
        %v853 = vpop.f32.mrb[0].mxu0
        %v854 = vadd.f32 %v755, %v853
        %v855 = vpop.f32.mrb[0].mxu0
        %856 = vmatprep.mubr.bf16.mxu0 0
        %857 = vmatmul.mubr.bf16.gmra.mrb[0].mxu0 %v798
        %v858 = vpop.f32.mrb[0].mxu0
        %v859 = vadd.f32 %v760, %v858
        %v860 = vpop.f32.mrb[0].mxu0
        %v861 = vpop.f32.mrb[0].mxu0
        %v862 = vadd.f32 %v765, %v861
        %v863 = vpop.f32.mrb[0].mxu0
        %864 = vdwg.mxu0
        %v865 = vmul.f32 %v835, 0.5
        %v866 = vmul.f32 %v838, 0.5
        %v867 = vmul.f32 %v843, 0.5
        %v868 = vmul.f32 %v846, 0.5
        %v869 = vmul.f32 %v851, 0.5
        %v870 = vmul.f32 %v854, 0.5
        %v871 = vmul.f32 %v859, 0.5
        %v872 = vmul.f32 %v862, 0.5
        %v873 = vrcp.pop 1.4142135
        %v874 = vmul.f32 %v835, %v873
        %v875 = vmul.f32 %v838, %v873
        %v876 = vmul.f32 %v843, %v873
        %v877 = vmul.f32 %v846, %v873
        %v878 = vmul.f32 %v851, %v873
        %v879 = vmul.f32 %v854, %v873
        %v880 = vmul.f32 %v859, %v873
        %v881 = vmul.f32 %v862, %v873
        %v882 = verf.f32.pop %v874
        %v883 = verf.f32.pop %v875
        %v884 = verf.f32.pop %v876
        %v885 = verf.f32.pop %v877
        %v886 = verf.f32.pop %v878
        %v887 = verf.f32.pop %v879
        %v888 = verf.f32.pop %v880
        %v889 = verf.f32.pop %v881
        %v890 = vadd.f32 %v882, 1.0
        %v891 = vadd.f32 %v883, 1.0
        %v892 = vadd.f32 %v884, 1.0
        %v893 = vadd.f32 %v885, 1.0
        %v894 = vadd.f32 %v886, 1.0
        %v895 = vadd.f32 %v887, 1.0
        %v896 = vadd.f32 %v888, 1.0
        %v897 = vadd.f32 %v889, 1.0
        %v898 = vmul.f32 %v865, %v890
        %v899 = vmul.f32 %v866, %v891
        %v900 = vmul.f32 %v867, %v892
        %v901 = vmul.f32 %v868, %v893
        %v902 = vmul.f32 %v869, %v894
        %v903 = vmul.f32 %v870, %v895
        %v904 = vmul.f32 %v871, %v896
        %v905 = vmul.f32 %v872, %v897
        %v906 = vld [vmem:[%s6] sm:$0xf]
        %v907 = vld [vmem:[%s6 + $0x4] sm:$0xf]
        %v908 = vpack.c.bf16 %v899, %v898
        %v909 = vpack.c.bf16 %v901, %v900
        %v910 = vpack.c.bf16 %v903, %v902
        %v911 = vpack.c.bf16 %v905, %v904
        %v912 = vld [vmem:[%s7] sm:$0xff]
        %v913 = vld [vmem:[%s7 + $0x8] sm:$0xff]
        %915 = vset.pattern.permute.xlu0 0
        %916 = vperm.xlu0 %915, %v912
        %v917 = vpop.permute.xlu0 %916
        %920 = vset.pattern.permute.xlu0 0
        %921 = vperm.xlu0 %920, %v913
        %v922 = vpop.permute.xlu0 %921
        %v926 = vunpack.c.l.b16 %v906
        %v927 = vunpack.c.l.b16 %v907
        %v928 = vpack.c.b16 %v927, %v926
        %vm929 = vcmask 523264
        %v931 = vsel %vm929, %v928, 0
        %933 = vmatprep.subr.bf16.mxu0 0
        %934 = vmatpush1.bf16.msra.mxu0 %v908
        %935 = vmatprep.subr.bf16.mxu0 0
        %936 = vmatpush1.bf16.msra.mxu0 %v909
        %937 = vmatprep.subr.bf16.mxu0 0
        %938 = vmatpush1.bf16.msra.mxu0 %v910
        %939 = vmatprep.subr.bf16.mxu0 0
        %940 = vmatpush1.bf16.msra.mxu0 %v911
        %941 = vmatprep.subr.bf16.mxu0 0
        %942 = vmatpush1.bf16.msra.mxu0 0
        %943 = vmatprep.subr.bf16.mxu0 0
        %944 = vmatpush1.bf16.msra.mxu0 0
        %945 = vmatprep.subr.bf16.mxu0 0
        %946 = vmatpush1.bf16.msra.mxu0 0
        %947 = vmatprep.subr.bf16.mxu0 0
        %948 = vmatpush1.bf16.msra.mxu0 0
        %949 = vmatprep.subr.bf16.mxu0 0
        %950 = vmatpush1.bf16.msra.mxu0 0
        %951 = vmatprep.subr.bf16.mxu0 0
        %952 = vmatpush1.bf16.msra.mxu0 0
        %953 = vmatprep.subr.bf16.mxu0 0
        %954 = vmatpush1.bf16.msra.mxu0 0
        %955 = vmatprep.subr.bf16.mxu0 0
        %956 = vmatpush1.bf16.msra.mxu0 0
        %957 = vmatprep.subr.bf16.mxu0 0
        %958 = vmatpush1.bf16.msra.mxu0 0
        %959 = vmatprep.subr.bf16.mxu0 0
        %960 = vmatpush1.bf16.msra.mxu0 0
        %961 = vmatprep.subr.bf16.mxu0 0
        %962 = vmatpush1.bf16.msra.mxu0 0
        %963 = vmatprep.subr.bf16.mxu0 0
        %964 = vmatpush1.bf16.msra.mxu0 0
        %965 = vmatprep.mubr.bf16.mxu0 0
        %966 = vmatmul.mubr.bf16.gmra.mrb[0].mxu0 %v931
        %v967 = vpop.f32.mrb[0].mxu0
        %v968 = vadd.f32 %v917, %v967
        %v969 = vpop.f32.mrb[0].mxu0
        %v970 = vpop.f32.mrb[0].mxu0
        %v971 = vadd.f32 %v922, %v970
        %v972 = vpop.f32.mrb[0].mxu0
        %973 = vdwg.mxu0
        %v974 = vadd.f32 %v516, %v968
        %v975 = vadd.f32 %v517, %v971
        %v976 = vld [vmem:[%s8] sm:$0x1]
        %v977 = vld [vmem:[%s9] sm:$0x1]
        %978 = vmatprep.subr.mxu0 0.0
        %979 = vmatpush1.msra.mxu0 %v518
        %980 = vmatprep.subr.mxu0 0.0
        %981 = vmatpush1.msra.mxu0 %v519
        %982 = vmatprep.subr.mxu0 0.0
        %983 = vmatpush1.msra.mxu0 %v520
        %984 = vmatprep.subr.mxu0 0.0
        %985 = vmatpush1.msra.mxu0 %v521
        %986 = vmatprep.subr.mxu0 0.0
        %987 = vmatpush1.msra.mxu0 %v522
        %988 = vmatprep.subr.mxu0 0.0
        %989 = vmatpush1.msra.mxu0 %v523
        %990 = vmatprep.subr.mxu0 0.0
        %991 = vmatpush1.msra.mxu0 %v524
        %992 = vmatprep.subr.mxu0 0.0
        %993 = vmatpush1.msra.mxu0 %v525
        %994 = vmatprep.subr.mxu0 0.0
        %995 = vmatpush1.msra.mxu0 %v526
        %996 = vmatprep.subr.mxu0 0.0
        %997 = vmatpush1.msra.mxu0 %v527
        %998 = vmatprep.subr.mxu0 0.0
        %999 = vmatpush1.msra.mxu0 %v528
        %1000 = vmatprep.subr.mxu0 0.0
        %1001 = vmatpush1.msra.mxu0 %v529
        %1002 = vmatprep.subr.mxu0 0.0
        %1003 = vmatpush1.msra.mxu0 %v530
        %1004 = vmatprep.subr.mxu0 0.0
        %1005 = vmatpush1.msra.mxu0 %v531
        %1006 = vmatprep.subr.mxu0 0.0
        %1007 = vmatpush1.msra.mxu0 %v532
        %1008 = vmatprep.subr.mxu0 0.0
        %1009 = vmatpush1.msra.mxu0 %v533
        %1010 = vmatprep.subr.mxu0 0.0
        %1011 = vmatpush1.msra.mxu0 0.0
        %1012 = vmatprep.subr.mxu0 0.0
        %1013 = vmatpush1.msra.mxu0 0.0
        %1014 = vmatprep.subr.mxu0 0.0
        %1015 = vmatpush1.msra.mxu0 0.0
        %1016 = vmatprep.subr.mxu0 0.0
        %1017 = vmatpush1.msra.mxu0 0.0
        %1018 = vmatprep.subr.mxu0 0.0
        %1019 = vmatpush1.msra.mxu0 0.0
        %1020 = vmatprep.subr.mxu0 0.0
        %1021 = vmatpush1.msra.mxu0 0.0
        %1022 = vmatprep.subr.mxu0 0.0
        %1023 = vmatpush1.msra.mxu0 0.0
        %1024 = vmatprep.subr.mxu0 0.0
        %1025 = vmatpush1.msra.mxu0 0.0
        %1026 = vmatprep.subr.mxu0 0.0
        %1027 = vmatpush1.msra.mxu0 0.0
        %1028 = vmatprep.subr.mxu0 0.0
        %1029 = vmatpush1.msra.mxu0 0.0
        %1030 = vmatprep.subr.mxu0 0.0
        %1031 = vmatpush1.msra.mxu0 0.0
        %1032 = vmatprep.subr.mxu0 0.0
        %1033 = vmatpush1.msra.mxu0 0.0
        %1034 = vmatprep.subr.mxu0 0.0
        %1035 = vmatpush1.msra.mxu0 0.0
        %1036 = vmatprep.subr.mxu0 0.0
        %1037 = vmatpush1.msra.mxu0 0.0
        %1038 = vmatprep.subr.mxu0 0.0
        %1039 = vmatpush1.msra.mxu0 0.0
        %1040 = vmatprep.subr.mxu0 0.0
        %1041 = vmatpush1.msra.mxu0 0.0
        %1042 = vmatprep.mubr.f32.mxu0 0.0
        %1043 = vmatmul.mubr.f32.gmra.mrb[0].mxu0 %v974
        %v1044 = vpop.f32.mrb[0].mxu0
        %v1045 = vadd.f32 0.0, %v1044
        %v1046 = vpop.f32.mrb[0].mxu0
        %1047 = vmatprep.mubr.f32.mxu0 0.0
        %1048 = vmatmul.mubr.f32.gmra.mrb[0].mxu0 %v975
        %v1049 = vpop.f32.mrb[0].mxu0
        %v1050 = vadd.f32 0.0, %v1049
        %v1051 = vpop.f32.mrb[0].mxu0
        %1052 = vdwg.mxu0
        %v1053 = vsub.f32 %v974, %v1045
        %v1054 = vsub.f32 %v975, %v1050
        %v1055 = vmul.f32 %v1053, %v1053
        %v1056 = vmul.f32 %v1054, %v1054
        %1057 = vmatprep.subr.mxu0 0.0
        %1058 = vmatpush1.msra.mxu0 %v518
        %1059 = vmatprep.subr.mxu0 0.0
        %1060 = vmatpush1.msra.mxu0 %v519
        %1061 = vmatprep.subr.mxu0 0.0
        %1062 = vmatpush1.msra.mxu0 %v520
        %1063 = vmatprep.subr.mxu0 0.0
        %1064 = vmatpush1.msra.mxu0 %v521
        %1065 = vmatprep.subr.mxu0 0.0
        %1066 = vmatpush1.msra.mxu0 %v522
        %1067 = vmatprep.subr.mxu0 0.0
        %1068 = vmatpush1.msra.mxu0 %v523
        %1069 = vmatprep.subr.mxu0 0.0
        %1070 = vmatpush1.msra.mxu0 %v524
        %1071 = vmatprep.subr.mxu0 0.0
        %1072 = vmatpush1.msra.mxu0 %v525
        %1073 = vmatprep.subr.mxu0 0.0
        %1074 = vmatpush1.msra.mxu0 %v526
        %1075 = vmatprep.subr.mxu0 0.0
        %1076 = vmatpush1.msra.mxu0 %v527
        %1077 = vmatprep.subr.mxu0 0.0
        %1078 = vmatpush1.msra.mxu0 %v528
        %1079 = vmatprep.subr.mxu0 0.0
        %1080 = vmatpush1.msra.mxu0 %v529
        %1081 = vmatprep.subr.mxu0 0.0
        %1082 = vmatpush1.msra.mxu0 %v530
        %1083 = vmatprep.subr.mxu0 0.0
        %1084 = vmatpush1.msra.mxu0 %v531
        %1085 = vmatprep.subr.mxu0 0.0
        %1086 = vmatpush1.msra.mxu0 %v532
        %1087 = vmatprep.subr.mxu0 0.0
        %1088 = vmatpush1.msra.mxu0 %v533
        %1089 = vmatprep.subr.mxu0 0.0
        %1090 = vmatpush1.msra.mxu0 0.0
        %1091 = vmatprep.subr.mxu0 0.0
        %1092 = vmatpush1.msra.mxu0 0.0
        %1093 = vmatprep.subr.mxu0 0.0
        %1094 = vmatpush1.msra.mxu0 0.0
        %1095 = vmatprep.subr.mxu0 0.0
        %1096 = vmatpush1.msra.mxu0 0.0
        %1097 = vmatprep.subr.mxu0 0.0
        %1098 = vmatpush1.msra.mxu0 0.0
        %1099 = vmatprep.subr.mxu0 0.0
        %1100 = vmatpush1.msra.mxu0 0.0
        %1101 = vmatprep.subr.mxu0 0.0
        %1102 = vmatpush1.msra.mxu0 0.0
        %1103 = vmatprep.subr.mxu0 0.0
        %1104 = vmatpush1.msra.mxu0 0.0
        %1105 = vmatprep.subr.mxu0 0.0
        %1106 = vmatpush1.msra.mxu0 0.0
        %1107 = vmatprep.subr.mxu0 0.0
        %1108 = vmatpush1.msra.mxu0 0.0
        %1109 = vmatprep.subr.mxu0 0.0
        %1110 = vmatpush1.msra.mxu0 0.0
        %1111 = vmatprep.subr.mxu0 0.0
        %1112 = vmatpush1.msra.mxu0 0.0
        %1113 = vmatprep.subr.mxu0 0.0
        %1114 = vmatpush1.msra.mxu0 0.0
        %1115 = vmatprep.subr.mxu0 0.0
        %1116 = vmatpush1.msra.mxu0 0.0
        %1117 = vmatprep.subr.mxu0 0.0
        %1118 = vmatpush1.msra.mxu0 0.0
        %1119 = vmatprep.subr.mxu0 0.0
        %1120 = vmatpush1.msra.mxu0 0.0
        %1121 = vmatprep.mubr.f32.mxu0 0.0
        %1122 = vmatmul.mubr.f32.gmra.mrb[0].mxu0 %v1055
        %v1123 = vpop.f32.mrb[0].mxu0
        %v1124 = vadd.f32 1e-05, %v1123
        %v1125 = vpop.f32.mrb[0].mxu0
        %1126 = vmatprep.mubr.f32.mxu0 0.0
        %1127 = vmatmul.mubr.f32.gmra.mrb[0].mxu0 %v1056
        %v1128 = vpop.f32.mrb[0].mxu0
        %v1129 = vadd.f32 1e-05, %v1128
        %v1130 = vpop.f32.mrb[0].mxu0
        %1131 = vdwg.mxu0
        %v1132 = vrsqrt.pop %v1124
        %v1133 = vrsqrt.pop %v1129
        %v1134 = vmul.f32 %v1053, %v1132
        %v1135 = vmul.f32 %v1054, %v1133
        %v1137 = vlaneseq
        %v1138 = vshrl.u32 %v1137, 7
        %v1139 = vsub.s32 0, %v1138
        %v1140 = vrot.slane %v976, %v1139
        %v1142 = vmul.f32 %v1134, %v1140
        %v1143 = vmul.f32 %v1135, %v1140
        %v1145 = vlaneseq
        %v1146 = vshrl.u32 %v1145, 7
        %v1147 = vsub.s32 0, %v1146
        %v1148 = vrot.slane %v977, %v1147
        %v1150 = vadd.f32 %v1142, %v1148
        %v1151 = vadd.f32 %v1143, %v1148
        %v1152 = vpack.c.bf16 %v1151, %v1150
        %v1153 = vld [vmem:[%s10] sm:$0xff]
        %v1154 = vld [vmem:[%s10 + $0x8] sm:$0xff]
        %v1155 = vld [vmem:[%s10 + $0x10] sm:$0xff]
        %v1156 = vld [vmem:[%s10 + $0x18] sm:$0xff]
        %v1157 = vld [vmem:[%s10 + $0x20] sm:$0xff]
        %v1158 = vld [vmem:[%s10 + $0x28] sm:$0xff]
        %v1159 = vld [vmem:[%s10 + $0x30] sm:$0xff]
        %v1160 = vld [vmem:[%s10 + $0x38] sm:$0xff]
        %v1161 = vld [vmem:[%s10 + $0x40] sm:$0xff]
        %v1162 = vld [vmem:[%s10 + $0x48] sm:$0xff]
        %v1163 = vld [vmem:[%s10 + $0x50] sm:$0xff]
        %v1164 = vld [vmem:[%s10 + $0x58] sm:$0xff]
        %v1165 = vld [vmem:[%s10 + $0x60] sm:$0xff]
        %v1166 = vld [vmem:[%s10 + $0x68] sm:$0xff]
        %v1167 = vld [vmem:[%s10 + $0x70] sm:$0xff]
        %v1168 = vld [vmem:[%s10 + $0x78] sm:$0xff]
        %v1169 = vld [vmem:[%s11] sm:$0x3]
        %v1171 = vlaneseq
        %v1172 = vshrl.u32 %v1171, 7
        %v1173 = vsub.s32 0, %v1172
        %v1174 = vrot.slane %v1169, %v1173
        %v1175 = vlaneseq
        %v1176 = vshrl.u32 %v1175, 7
        %v1177 = vsub.s32 1, %v1176
        %v1178 = vrot.slane %v1169, %v1177
        %v1197 = vunpack.c.l.b16 %v1153
        %v1198 = vunpack.c.h.b16 %v1153
        %v1199 = vunpack.c.l.b16 %v1154
        %v1200 = vunpack.c.h.b16 %v1154
        %v1201 = vunpack.c.l.b16 %v1155
        %v1202 = vunpack.c.h.b16 %v1155
        %v1203 = vunpack.c.l.b16 %v1156
        %v1204 = vunpack.c.h.b16 %v1156
        %v1205 = vunpack.c.l.b16 %v1157
        %v1206 = vunpack.c.h.b16 %v1157
        %v1207 = vunpack.c.l.b16 %v1158
        %v1208 = vunpack.c.h.b16 %v1158
        %v1209 = vunpack.c.l.b16 %v1159
        %v1210 = vunpack.c.h.b16 %v1159
        %v1211 = vunpack.c.l.b16 %v1160
        %v1212 = vunpack.c.h.b16 %v1160
        %v1213 = vunpack.c.l.b16 %v1161
        %v1214 = vunpack.c.h.b16 %v1161
        %v1215 = vunpack.c.l.b16 %v1162
        %v1216 = vunpack.c.h.b16 %v1162
        %v1217 = vunpack.c.l.b16 %v1163
        %v1218 = vunpack.c.h.b16 %v1163
        %v1219 = vunpack.c.l.b16 %v1164
        %v1220 = vunpack.c.h.b16 %v1164
        %v1221 = vunpack.c.l.b16 %v1165
        %v1222 = vunpack.c.h.b16 %v1165
        %v1223 = vunpack.c.l.b16 %v1166
        %v1224 = vunpack.c.h.b16 %v1166
        %v1225 = vunpack.c.l.b16 %v1167
        %v1226 = vunpack.c.h.b16 %v1167
        %v1227 = vunpack.c.l.b16 %v1168
        %v1228 = vunpack.c.h.b16 %v1168
        %v1229 = vpack.c.b16 %v1199, %v1197
        %v1230 = vpack.c.b16 %v1200, %v1198
        %v1231 = vpack.c.b16 %v1203, %v1201
        %v1232 = vpack.c.b16 %v1204, %v1202
        %v1233 = vpack.c.b16 %v1207, %v1205
        %v1234 = vpack.c.b16 %v1208, %v1206
        %v1235 = vpack.c.b16 %v1211, %v1209
        %v1236 = vpack.c.b16 %v1212, %v1210
        %v1237 = vpack.c.b16 %v1215, %v1213
        %v1238 = vpack.c.b16 %v1216, %v1214
        %v1239 = vpack.c.b16 %v1219, %v1217
        %v1240 = vpack.c.b16 %v1220, %v1218
        %v1241 = vpack.c.b16 %v1223, %v1221
        %v1242 = vpack.c.b16 %v1224, %v1222
        %v1243 = vpack.c.b16 %v1227, %v1225
        %v1244 = vpack.c.b16 %v1228, %v1226
        %1261 = vmatprep.subr.bf16.mxu0 %v1230
        %1262 = vmatpush1.bf16.msra.mxu0 %v1229
        %1263 = vmatprep.subr.bf16.mxu0 %v1232
        %1264 = vmatpush1.bf16.msra.mxu0 %v1231
        %1265 = vmatprep.subr.bf16.mxu0 %v1234
        %1266 = vmatpush1.bf16.msra.mxu0 %v1233
        %1267 = vmatprep.subr.bf16.mxu0 %v1236
        %1268 = vmatpush1.bf16.msra.mxu0 %v1235
        %1269 = vmatprep.subr.bf16.mxu0 %v1238
        %1270 = vmatpush1.bf16.msra.mxu0 %v1237
        %1271 = vmatprep.subr.bf16.mxu0 %v1240
        %1272 = vmatpush1.bf16.msra.mxu0 %v1239
        %1273 = vmatprep.subr.bf16.mxu0 %v1242
        %1274 = vmatpush1.bf16.msra.mxu0 %v1241
        %1275 = vmatprep.subr.bf16.mxu0 %v1244
        %1276 = vmatpush1.bf16.msra.mxu0 %v1243
        %1277 = vmatprep.subr.bf16.mxu0 0
        %1278 = vmatpush1.bf16.msra.mxu0 0
        %1279 = vmatprep.subr.bf16.mxu0 0
        %1280 = vmatpush1.bf16.msra.mxu0 0
        %1281 = vmatprep.subr.bf16.mxu0 0
        %1282 = vmatpush1.bf16.msra.mxu0 0
        %1283 = vmatprep.subr.bf16.mxu0 0
        %1284 = vmatpush1.bf16.msra.mxu0 0
        %1285 = vmatprep.subr.bf16.mxu0 0
        %1286 = vmatpush1.bf16.msra.mxu0 0
        %1287 = vmatprep.subr.bf16.mxu0 0
        %1288 = vmatpush1.bf16.msra.mxu0 0
        %1289 = vmatprep.subr.bf16.mxu0 0
        %1290 = vmatpush1.bf16.msra.mxu0 0
        %1291 = vmatprep.subr.bf16.mxu0 0
        %1292 = vmatpush1.bf16.msra.mxu0 0
        %1293 = vmatprep.mubr.bf16.mxu0 0
        %1294 = vmatmul.mubr.bf16.gmra.mrb[0].mxu0 %v1152
        %v1295 = vpop.f32.mrb[0].mxu0
        %v1296 = vadd.f32 %v1174, %v1295
        %v1297 = vpop.f32.mrb[0].mxu0
        %v1298 = vadd.f32 %v1178, %v1297
        %v1299 = vpop.f32.mrb[0].mxu0
        %v1300 = vadd.f32 %v1174, %v1299
        %v1301 = vpop.f32.mrb[0].mxu0
        %v1302 = vadd.f32 %v1178, %v1301
        %1303 = vdwg.mxu0
        %v1304 = vmul.f32 %v1296, 0.5
        %v1305 = vmul.f32 %v1298, 0.5
        %v1306 = vmul.f32 %v1300, 0.5
        %v1307 = vmul.f32 %v1302, 0.5
        %v1308 = vmul.f32 %v1296, %v873
        %v1309 = vmul.f32 %v1298, %v873
        %v1310 = vmul.f32 %v1300, %v873
        %v1311 = vmul.f32 %v1302, %v873
        %v1312 = verf.f32.pop %v1308
        %v1313 = verf.f32.pop %v1309
        %v1314 = verf.f32.pop %v1310
        %v1315 = verf.f32.pop %v1311
        %v1316 = vadd.f32 %v1312, 1.0
        %v1317 = vadd.f32 %v1313, 1.0
        %v1318 = vadd.f32 %v1314, 1.0
        %v1319 = vadd.f32 %v1315, 1.0
        %v1320 = vmul.f32 %v1304, %v1316
        %v1321 = vmul.f32 %v1305, %v1317
        %v1322 = vmul.f32 %v1306, %v1318
        %v1323 = vmul.f32 %v1307, %v1319
        %v1324 = vpack.c.bf16 %v1322, %v1320
        %v1325 = vpack.c.bf16 %v1323, %v1321
        %v1326 = vld [vmem:[#allocation7] sm:$0xf]
        %v1327 = vld [vmem:[#allocation7 + $0x4] sm:$0xf]
        %v1328 = vld [vmem:[#allocation7 + $0x8] sm:$0xf]
        %v1329 = vld [vmem:[#allocation7 + $0xc] sm:$0xf]
        %v1330 = vld [vmem:[#allocation7 + $0x10] sm:$0xf]
        %v1331 = vld [vmem:[#allocation7 + $0x14] sm:$0xf]
        %v1332 = vld [vmem:[#allocation7 + $0x18] sm:$0xf]
        %v1333 = vld [vmem:[#allocation7 + $0x1c] sm:$0xf]
        %v1334 = vld [vmem:[#allocation7 + $0x20] sm:$0xf]
        %v1335 = vld [vmem:[#allocation7 + $0x24] sm:$0xf]
        %v1336 = vld [vmem:[#allocation7 + $0x28] sm:$0xf]
        %v1337 = vld [vmem:[#allocation7 + $0x2c] sm:$0xf]
        %v1338 = vld [vmem:[#allocation7 + $0x30] sm:$0xf]
        %v1339 = vld [vmem:[#allocation7 + $0x34] sm:$0xf]
        %v1340 = vld [vmem:[#allocation7 + $0x38] sm:$0xf]
        %v1341 = vld [vmem:[#allocation7 + $0x3c] sm:$0xf]
        %v1342 = vld [vmem:[#allocation7 + $0x40] sm:$0xf]
        %v1343 = vld [vmem:[#allocation7 + $0x44] sm:$0xf]
        %v1344 = vld [vmem:[#allocation7 + $0x48] sm:$0xf]
        %v1345 = vld [vmem:[#allocation7 + $0x4c] sm:$0xf]
        %v1346 = vld [vmem:[#allocation7 + $0x50] sm:$0xf]
        %v1347 = vld [vmem:[#allocation7 + $0x54] sm:$0xf]
        %v1348 = vld [vmem:[#allocation7 + $0x58] sm:$0xf]
        %v1349 = vld [vmem:[#allocation7 + $0x5c] sm:$0xf]
        %v1350 = vld [vmem:[#allocation7 + $0x60] sm:$0xf]
        %v1351 = vld [vmem:[#allocation7 + $0x64] sm:$0xf]
        %v1352 = vld [vmem:[#allocation7 + $0x68] sm:$0xf]
        %v1353 = vld [vmem:[#allocation7 + $0x6c] sm:$0xf]
        %v1354 = vld [vmem:[#allocation7 + $0x70] sm:$0xf]
        %v1355 = vld [vmem:[#allocation7 + $0x74] sm:$0xf]
        %v1356 = vld [vmem:[#allocation7 + $0x78] sm:$0xf]
        %v1357 = vld [vmem:[#allocation7 + $0x7c] sm:$0xf]
        %v1358 = vld [vmem:[%s13] sm:$0x1]
        %v1360 = vlaneseq
        %v1361 = vshrl.u32 %v1360, 7
        %v1362 = vsub.s32 0, %v1361
        %v1363 = vrot.slane %v1358, %v1362
        %v1397 = vunpack.c.l.b16 %v1326
        %v1398 = vunpack.c.l.b16 %v1327
        %v1399 = vunpack.c.l.b16 %v1328
        %v1400 = vunpack.c.l.b16 %v1329
        %v1401 = vunpack.c.l.b16 %v1330
        %v1402 = vunpack.c.l.b16 %v1331
        %v1403 = vunpack.c.l.b16 %v1332
        %v1404 = vunpack.c.l.b16 %v1333
        %v1405 = vunpack.c.l.b16 %v1334
        %v1406 = vunpack.c.l.b16 %v1335
        %v1407 = vunpack.c.l.b16 %v1336
        %v1408 = vunpack.c.l.b16 %v1337
        %v1409 = vunpack.c.l.b16 %v1338
        %v1410 = vunpack.c.l.b16 %v1339
        %v1411 = vunpack.c.l.b16 %v1340
        %v1412 = vunpack.c.l.b16 %v1341
        %v1413 = vunpack.c.l.b16 %v1342
        %v1414 = vunpack.c.l.b16 %v1343
        %v1415 = vunpack.c.l.b16 %v1344
        %v1416 = vunpack.c.l.b16 %v1345
        %v1417 = vunpack.c.l.b16 %v1346
        %v1418 = vunpack.c.l.b16 %v1347
        %v1419 = vunpack.c.l.b16 %v1348
        %v1420 = vunpack.c.l.b16 %v1349
        %v1421 = vunpack.c.l.b16 %v1350
        %v1422 = vunpack.c.l.b16 %v1351
        %v1423 = vunpack.c.l.b16 %v1352
        %v1424 = vunpack.c.l.b16 %v1353
        %v1425 = vunpack.c.l.b16 %v1354
        %v1426 = vunpack.c.l.b16 %v1355
        %v1427 = vunpack.c.l.b16 %v1356
        %v1428 = vunpack.c.l.b16 %v1357
        %v1429 = vpack.c.b16 %v1398, %v1397
        %v1430 = vpack.c.b16 %v1400, %v1399
        %v1431 = vpack.c.b16 %v1402, %v1401
        %v1432 = vpack.c.b16 %v1404, %v1403
        %v1433 = vpack.c.b16 %v1406, %v1405
        %v1434 = vpack.c.b16 %v1408, %v1407
        %v1435 = vpack.c.b16 %v1410, %v1409
        %v1436 = vpack.c.b16 %v1412, %v1411
        %v1437 = vpack.c.b16 %v1414, %v1413
        %v1438 = vpack.c.b16 %v1416, %v1415
        %v1439 = vpack.c.b16 %v1418, %v1417
        %v1440 = vpack.c.b16 %v1420, %v1419
        %v1441 = vpack.c.b16 %v1422, %v1421
        %v1442 = vpack.c.b16 %v1424, %v1423
        %v1443 = vpack.c.b16 %v1426, %v1425
        %v1444 = vpack.c.b16 %v1428, %v1427
        %1461 = vmatprep.subr.bf16.mxu0 0
        %1462 = vmatpush1.bf16.msra.mxu0 %v1429
        %1463 = vmatprep.subr.bf16.mxu0 0
        %1464 = vmatpush1.bf16.msra.mxu0 %v1430
        %1465 = vmatprep.subr.bf16.mxu0 0
        %1466 = vmatpush1.bf16.msra.mxu0 %v1431
        %1467 = vmatprep.subr.bf16.mxu0 0
        %1468 = vmatpush1.bf16.msra.mxu0 %v1432
        %1469 = vmatprep.subr.bf16.mxu0 0
        %1470 = vmatpush1.bf16.msra.mxu0 %v1433
        %1471 = vmatprep.subr.bf16.mxu0 0
        %1472 = vmatpush1.bf16.msra.mxu0 %v1434
        %1473 = vmatprep.subr.bf16.mxu0 0
        %1474 = vmatpush1.bf16.msra.mxu0 %v1435
        %1475 = vmatprep.subr.bf16.mxu0 0
        %1476 = vmatpush1.bf16.msra.mxu0 %v1436
        %1477 = vmatprep.subr.bf16.mxu0 0
        %1478 = vmatpush1.bf16.msra.mxu0 %v1437
        %1479 = vmatprep.subr.bf16.mxu0 0
        %1480 = vmatpush1.bf16.msra.mxu0 %v1438
        %1481 = vmatprep.subr.bf16.mxu0 0
        %1482 = vmatpush1.bf16.msra.mxu0 %v1439
        %1483 = vmatprep.subr.bf16.mxu0 0
        %1484 = vmatpush1.bf16.msra.mxu0 %v1440
        %1485 = vmatprep.subr.bf16.mxu0 0
        %1486 = vmatpush1.bf16.msra.mxu0 %v1441
        %1487 = vmatprep.subr.bf16.mxu0 0
        %1488 = vmatpush1.bf16.msra.mxu0 %v1442
        %1489 = vmatprep.subr.bf16.mxu0 0
        %1490 = vmatpush1.bf16.msra.mxu0 %v1443
        %1491 = vmatprep.subr.bf16.mxu0 0
        %1492 = vmatpush1.bf16.msra.mxu0 %v1444
        %1493 = vmatprep.mubr.bf16.mxu0 %v1325
        %1494 = vmatmul.mubr.bf16.gmra.mrb[0].mxu0 %v1324
        %v1495 = vpop.f32.mrb[0].mxu0
        %v1496 = vadd.f32 %v1363, %v1495
        %v1497 = vpop.f32.mrb[0].mxu0
        %v1498 = vpop.f32.mrb[0].mxu0
        %v1499 = vadd.f32 %v1363, %v1498
        %v1500 = vpop.f32.mrb[0].mxu0
        %1501 = vdwg.mxu0
        %v1502 = vadd.f32 %v974, %v1496
        %v1503 = vadd.f32 %v975, %v1499
        %1504 = vst [vmem:[%s514] sm:$0xff] %v1502
        %1505 = vst [vmem:[%s514 + $0x8] sm:$0xff] %v1503
        %s1506 = sand.u32 %s339, 1
        %s1507 = scalar_lea.sflag [#allocation4], %s1506
        %s1508 = sand.u32 %s339, 1
        %s1509 = smul.addr %s1508, 16
        %s1510 = scalar_lea.vmem [#allocation8], %s1509
        // Predicated region
        $region89: #{tpu_custom_call.1} parent=75 // pred_check
          %p1511 = pneg %p349
        $region90: #{tpu_custom_call.1} parent=75 // pred_check_branch
          %1513 = sbr.rel (%p1511) target = $region92
        $region91: #{tpu_custom_call.1} parent=75 // pred_region
          %s1515 = ssub.s32 256, 256
          %1516 = vsyncadd %s1507, %s1515
          %s1517 = smul.addr %s32, 2
          %s1518 = smul.addr %s1517, 128
          %s1519 = scalar_lea.hbm %s14, %s1518
          %s1520 = sshll.u32 %s1510, 4
          %s1521 = int_to_ptr.vmem [resolvable:$true] %s1520
          %1526 = dma.vmem_to_hbm [thread:$0]  %s1521, 256, %s1519, %s1507, 128, 128, 8
        $region92: #{tpu_custom_call.1} parent=75 // pred_fallthru
          _
      $region76: #{tpu_custom_call.1} parent=5 // pred_fallthru
        _
      %p1527 = scmp.le.s32.totalorder 2, %s27
      // Predicated region
      $region93: #{tpu_custom_call.1} parent=5 // pred_check
        %p1528 = pneg %p1527
      $region94: #{tpu_custom_call.1} parent=5 // pred_check_branch
        %1530 = sbr.rel (%p1528) target = $region96
      $region95: #{tpu_custom_call.1} parent=5 // pred_region
        %s1531 = ssub.s32 %s27, 2
        // Predicated region
        $region97: #{tpu_custom_call.1} parent=95 // pred_check
          %p1532 = pneg %p355
        $region98: #{tpu_custom_call.1} parent=95 // pred_check_branch
          %1534 = sbr.rel (%p1532) target = $region100
        $region99: #{tpu_custom_call.1} parent=95 // pred_region
          %s1535 = sand.u32 %s340, 1
          %s1536 = scalar_lea.sflag [#allocation4], %s1535
          %s1537 = sand.u32 %s340, 1
          %s1538 = smul.addr %s1537, 16
          %s1539 = scalar_lea.vmem [#allocation8], %s1538
          %1540 = dma.done %s1536, 256
        $region100: #{tpu_custom_call.1} parent=95 // pred_fallthru
          _
      $region96: #{tpu_custom_call.1} parent=5 // pred_fallthru
        _
    $region6: #{tpu_custom_call.1} parent=1 // loop_footer
      %s31 = sadd.s32 1, %s27
    $region7: #{tpu_custom_call.1} parent=1 // loop_footer_branch
      %26 = sbr.rel target = $region3
    $region8: #{tpu_custom_call.1} parent=1 // loop_exit
      _
    %1541 = vsyncpa [#allocation3], 1
    %s1542 = scalar_lea.sflag [#allocation3], 1
    %1543 = vsyncpa %s1542, 1
    %1544 = vsyncpa [#allocation6], 1
    %1545 = vsyncpa [#allocation4], 1
    %s1546 = scalar_lea.sflag [#allocation4], 1
    %1547 = vsyncpa %s1546, 1

</llo_original>
